<compile_context>
chip_gen: v7x
topology: tpu7x:2x2x1
jax: 0.10.0
libtpu: 0.0.40
codegen_flags: <defaults>
</compile_context>

<pallas_src>
import jax
import jax.numpy as jnp
from jax.experimental import pallas as pl
from jax.experimental.pallas import tpu as pltpu

HIDDEN = 1024        # hidden width of both inner Linear layers
OUT_DIM = 25         # final Linear output width
OUT_PAD = 128        # lane-dense padded output width (multiple of 128)
TN = 512             # streamed column tile of W2 / row tile of W3 (sweepable)
NUM_SPLITS = 2       # leading "parallel" axis: v7x TensorCores; sequential on v5e/v6e

assert HIDDEN % (NUM_SPLITS * TN) == 0


def mlp_kernel(x_ref, w1_ref, b1_ref, w2_ref, s2_ref, b2_ref, w3_ref, b3_ref,
               o_ref, h1_ref):
    c = pl.program_id(0)          # split index (one per TensorCore on v7x)
    n = pl.program_id(1)          # streamed K-block index within the split

    # First step of each split: layer 1 (Linear + ReLU) into a resident bf16
    # scratch, and init the lane-dense layer-3 partial accumulator.  The
    # layer-3 bias is folded into split 0's init; other splits start from 0
    # (partials are summed in the wrapper).
    @pl.when(n == 0)
    def _():
        h1 = jnp.dot(x_ref[...].astype(jnp.bfloat16), w1_ref[...],
                     preferred_element_type=jnp.float32)
        h1 = jnp.maximum(h1 + b1_ref[...], 0.0)
        h1_ref[...] = h1.astype(h1_ref.dtype)
        bias = jnp.where(c == 0, b3_ref[...], 0.0)
        o_ref[...] = jnp.broadcast_to(bias, o_ref.shape)

    # Streamed layer-2 column block: int8 weights -> bf16 (exact) on the VPU,
    # MXU matmul with f32 accumulation, per-column dequant scale applied to
    # the small (B, TN) result.
    h2 = jnp.dot(h1_ref[...], w2_ref[...].astype(jnp.bfloat16),
                 preferred_element_type=jnp.float32)
    h2 = jnp.maximum(h2 * s2_ref[...] + b2_ref[...], 0.0)

    # Layer-3 partial product: out_partial += h2_blk @ W3[blk, :]
    o_ref[...] += jnp.dot(h2.astype(jnp.bfloat16), w3_ref[...],
                          preferred_element_type=jnp.float32)[None]


def prepare_params(w1, b1, w2, b2, w3, b3):
    """One-time weight prep, hoisted out of the per-call path:
    bf16 cast of W1/W3, int8 per-output-column quantization of W2, and
    lane-dense padding of the 25-wide layer-3 output to 128."""
    out_dim = w3.shape[1]
    pad = OUT_PAD - out_dim
    assert pad >= 0

    # int8 + per-column scale for the dominant (1024, 1024) weight.
    s2 = jnp.maximum(jnp.max(jnp.abs(w2), axis=0, keepdims=True), 1e-12) / 127.0
    w2q = jnp.clip(jnp.round(w2 / s2), -127.0, 127.0).astype(jnp.int8)
    # TODO(synk): fp8 (e4m3) weights fed straight to the MXU on v7x would also
    # skip the in-kernel dequant cast if the accuracy budget allows.

    return (
        w1.astype(jnp.bfloat16),
        b1.astype(jnp.float32),
        w2q,
        s2.astype(jnp.float32),
        b2.astype(jnp.float32),
        jnp.pad(w3, ((0, 0), (0, pad))).astype(jnp.bfloat16),
        jnp.pad(b3, ((0, 0), (0, pad))).astype(jnp.float32),
    )


def linear_module_forward(x, params):
    """Forward of LinearModule on pre-prepared params; y = x @ W + b per layer."""
    w1b, b1, w2q, s2, b2, w3b, b3p = params
    B = x.shape[0]
    n_inner = HIDDEN // (NUM_SPLITS * TN)

    def const_spec(shape):
        nd = len(shape)
        return pl.BlockSpec(shape, lambda c, n: (0,) * nd)

    partials = pl.pallas_call(
        mlp_kernel,
        out_shape=jax.ShapeDtypeStruct((NUM_SPLITS, B, OUT_PAD), jnp.float32),
        grid=(NUM_SPLITS, n_inner),
        in_specs=[
            const_spec(x.shape),                              # x   (B, L)   f32
            const_spec(w1b.shape),                            # w1  (L,1024) bf16
            const_spec(b1.shape),                             # b1  (1,1024) f32
            pl.BlockSpec((HIDDEN, TN),                        # w2q streamed cols
                         lambda c, n: (0, c * n_inner + n)),
            pl.BlockSpec((1, TN),                             # s2  streamed cols
                         lambda c, n: (0, c * n_inner + n)),
            pl.BlockSpec((1, TN),                             # b2  streamed cols
                         lambda c, n: (0, c * n_inner + n)),
            pl.BlockSpec((TN, OUT_PAD),                       # w3  streamed rows
                         lambda c, n: (c * n_inner + n, 0)),
            const_spec(b3p.shape),                            # b3  (1, 128) f32
        ],
        out_specs=pl.BlockSpec((1, B, OUT_PAD), lambda c, n: (c, 0, 0)),
        scratch_shapes=[
            pltpu.VMEM((B, HIDDEN), jnp.bfloat16),            # resident layer-1 acts
        ],
        compiler_params=pltpu.CompilerParams(
            # Leading split axis may run on both v7x TensorCores (each owns its
            # own partial output + scratch); inner axis is the sequential
            # reduction that accumulates into the resident output block.
            dimension_semantics=("parallel", "arbitrary")),
    )(x, w1b, b1, w2q, s2, b2, w3b, b3p)

    out = jnp.sum(partials, axis=0)      # combine per-split partials (~4 KiB)
    return out[:, :OUT_DIM]


def init_linear_params(key, fan_in, fan_out):
    # Matches PyTorch nn.Linear default init: U(-1/sqrt(fan_in), 1/sqrt(fan_in))
    kw, kb = jax.random.split(key)
    bound = 1.0 / (fan_in ** 0.5)
    w = jax.random.uniform(kw, (fan_in, fan_out), jnp.float32, -bound, bound)
    b = jax.random.uniform(kb, (1, fan_out), jnp.float32, -bound, bound)
    return w, b


if __name__ == "__main__":
    length = 32      # "length" constructor arg of LinearModule
    batch = 8

    key = jax.random.PRNGKey(0)
    kx, k1, k2, k3 = jax.random.split(key, 4)

    x = jax.random.normal(kx, (batch, length), jnp.float32)
    w1, b1 = init_linear_params(k1, length, HIDDEN)
    w2, b2 = init_linear_params(k2, HIDDEN, HIDDEN)
    w3, b3 = init_linear_params(k3, HIDDEN, OUT_DIM)

    # One-time weight prep (cast / quantize / pad), amortized across calls.
    params = prepare_params(w1, b1, w2, b2, w3, b3)

    fwd = jax.jit(linear_module_forward)
    out = jax.block_until_ready(fwd(x, params))
    assert out.shape == (batch, OUT_DIM)

    # Reference along the same precision path (bf16 matmuls, f32 accumulation,
    # int8-dequantized W2) — tight tolerance.
    w1b, b1p, w2q, s2, b2p, w3b, b3p = params
    xb = x.astype(jnp.bfloat16)
    h1 = jnp.maximum(
        jnp.dot(xb, w1b, preferred_element_type=jnp.float32) + b1p, 0.0)
    h2 = jnp.dot(h1.astype(jnp.bfloat16), w2q.astype(jnp.bfloat16),
                 preferred_element_type=jnp.float32) * s2 + b2p
    h2 = jnp.maximum(h2, 0.0)
    ref = jnp.dot(h2.astype(jnp.bfloat16), w3b,
                  preferred_element_type=jnp.float32) + b3p
    ref = ref[:, :OUT_DIM]
    assert jnp.allclose(out, ref, atol=1e-2, rtol=1e-2), \
        float(jnp.max(jnp.abs(out - ref)))

    # Loose sanity check against the full-f32 PyTorch-equivalent forward
    # (bf16 + int8-weight rounding is well inside this budget).
    rf = jnp.maximum(x @ w1 + b1, 0.0)
    rf = jnp.maximum(rf @ w2 + b2, 0.0)
    rf = rf @ w3 + b3
    assert jnp.allclose(out, rf, atol=1e-1, rtol=1e-1), \
        float(jnp.max(jnp.abs(out - rf)))

    print("KERNEL_OK")
</pallas_src>

<mosaic_0001>
module attributes {stable_mosaic.version = 11 : i64} {
  func.func @mlp_kernel(%arg0: i32, %arg1: i32, %arg2: memref<8x32xf32, #tpu.memory_space<vmem>>, %arg3: memref<32x1024xbf16, #tpu.memory_space<vmem>>, %arg4: memref<1x1024xf32, #tpu.memory_space<vmem>>, %arg5: memref<1024x512xi8, #tpu.memory_space<vmem>>, %arg6: memref<1x512xf32, #tpu.memory_space<vmem>>, %arg7: memref<1x512xf32, #tpu.memory_space<vmem>>, %arg8: memref<512x128xbf16, #tpu.memory_space<vmem>>, %arg9: memref<1x128xf32, #tpu.memory_space<vmem>>, %arg10: memref<1x8x128xf32, #tpu.memory_space<vmem>>, %arg11: memref<8x1024xbf16, #tpu.memory_space<vmem>>) attributes {dimension_semantics = [#tpu.dimension_semantics<parallel>, #tpu.dimension_semantics<arbitrary>], iteration_bounds = array<i64: 2, 1>, scalar_prefetch = 0 : i64, scratch_operands = 1 : i64, tpu.core_type = #tpu.core_type<tc>, window_params = [{pipeline_mode = #tpu.pipeline_mode<synchronous>, transform_indices = @transform_0, window_bounds = array<i64: 8, 32>}, {pipeline_mode = #tpu.pipeline_mode<synchronous>, transform_indices = @transform_1, window_bounds = array<i64: 32, 1024>}, {pipeline_mode = #tpu.pipeline_mode<synchronous>, transform_indices = @transform_2, window_bounds = array<i64: 1, 1024>}, {transform_indices = @transform_3, window_bounds = array<i64: 1024, 512>}, {transform_indices = @transform_4, window_bounds = array<i64: 1, 512>}, {transform_indices = @transform_5, window_bounds = array<i64: 1, 512>}, {transform_indices = @transform_6, window_bounds = array<i64: 512, 128>}, {pipeline_mode = #tpu.pipeline_mode<synchronous>, transform_indices = @transform_7, window_bounds = array<i64: 1, 128>}, {transform_indices = @transform_8, window_bounds = array<i64: 1, 8, 128>}]} {
    %c0_i32 = arith.constant 0 : i32
    %0 = arith.cmpi eq, %arg1, %c0_i32 : i32
    %1 = arith.extui %0 : i1 to i32
    %c0_i32_0 = arith.constant 0 : i32
    %2 = arith.cmpi ne, %1, %c0_i32_0 : i32
    scf.if %2 {
      %c0_18 = arith.constant 0 : index
      %c0_19 = arith.constant 0 : index
      %22 = vector.load %arg2[%c0_18, %c0_19] : memref<8x32xf32, #tpu.memory_space<vmem>>, vector<8x32xf32>
      %23 = arith.truncf %22 : vector<8x32xf32> to vector<8x32xbf16>
      %c0_20 = arith.constant 0 : index
      %c0_21 = arith.constant 0 : index
      %24 = vector.load %arg3[%c0_20, %c0_21] : memref<32x1024xbf16, #tpu.memory_space<vmem>>, vector<32x1024xbf16>
      %cst_22 = arith.constant dense<0.000000e+00> : vector<8x1024xf32>
      %25 = tpu.matmul %23, %24, %cst_22 {dimension_numbers = #tpu.dot_dimension_numbers<[1], [0], [0], [1], [0, 0, 1, 1], [], []>} : vector<8x32xbf16>, vector<32x1024xbf16>, vector<8x1024xf32> -> vector<8x1024xf32>
      %c0_23 = arith.constant 0 : index
      %c0_24 = arith.constant 0 : index
      %26 = vector.load %arg4[%c0_23, %c0_24] : memref<1x1024xf32, #tpu.memory_space<vmem>>, vector<1x1024xf32>
      %27 = vector.broadcast %26 : vector<1x1024xf32> to vector<8x1024xf32>
      %28 = arith.addf %25, %27 : vector<8x1024xf32>
      %cst_25 = arith.constant 0.000000e+00 : f32
      %29 = vector.broadcast %cst_25 : f32 to vector<8x1024xf32>
      %30 = arith.maximumf %28, %29 : vector<8x1024xf32>
      %31 = arith.truncf %30 : vector<8x1024xf32> to vector<8x1024xbf16>
      %c0_26 = arith.constant 0 : index
      %c0_27 = arith.constant 0 : index
      %32 = vector.load %arg11[%c0_26, %c0_27] : memref<8x1024xbf16, #tpu.memory_space<vmem>>, vector<8x1024xbf16>
      tpu.vector_store %arg11[%c0_26, %c0_27], %31 {strides = array<i32>} : memref<8x1024xbf16, #tpu.memory_space<vmem>>, vector<8x1024xbf16>,
      %c0_i32_28 = arith.constant 0 : i32
      %33 = arith.cmpi eq, %arg0, %c0_i32_28 : i32
      %c0_29 = arith.constant 0 : index
      %c0_30 = arith.constant 0 : index
      %34 = vector.load %arg9[%c0_29, %c0_30] : memref<1x128xf32, #tpu.memory_space<vmem>>, vector<1x128xf32>
      %cst_31 = arith.constant 0.000000e+00 : f32
      %35 = vector.broadcast %cst_31 : f32 to vector<1x128xf32>
      %36 = arith.select %33, %34, %35 : vector<1x128xf32>
      %37 = vector.shape_cast %36 : vector<1x128xf32> to vector<1x1x128xf32>
      %38 = vector.broadcast %37 : vector<1x1x128xf32> to vector<1x8x128xf32>
      %c0_32 = arith.constant 0 : index
      %c0_33 = arith.constant 0 : index
      %c0_34 = arith.constant 0 : index
      %39 = vector.load %arg10[%c0_32, %c0_33, %c0_34] : memref<1x8x128xf32, #tpu.memory_space<vmem>>, vector<1x8x128xf32>
      tpu.vector_store %arg10[%c0_32, %c0_33, %c0_34], %38 {strides = array<i32>} : memref<1x8x128xf32, #tpu.memory_space<vmem>>, vector<1x8x128xf32>,
    } else {
    }
    %c0 = arith.constant 0 : index
    %c0_1 = arith.constant 0 : index
    %3 = vector.load %arg11[%c0, %c0_1] : memref<8x1024xbf16, #tpu.memory_space<vmem>>, vector<8x1024xbf16>
    %c0_2 = arith.constant 0 : index
    %c0_3 = arith.constant 0 : index
    %4 = vector.load %arg5[%c0_2, %c0_3] : memref<1024x512xi8, #tpu.memory_space<vmem>>, vector<1024x512xi8>
    %5 = arith.sitofp %4 : vector<1024x512xi8> to vector<1024x512xbf16>
    %cst = arith.constant dense<0.000000e+00> : vector<8x512xf32>
    %6 = tpu.matmul %3, %5, %cst {dimension_numbers = #tpu.dot_dimension_numbers<[1], [0], [0], [1], [0, 0, 1, 1], [], []>} : vector<8x1024xbf16>, vector<1024x512xbf16>, vector<8x512xf32> -> vector<8x512xf32>
    %c0_4 = arith.constant 0 : index
    %c0_5 = arith.constant 0 : index
    %7 = vector.load %arg6[%c0_4, %c0_5] : memref<1x512xf32, #tpu.memory_space<vmem>>, vector<1x512xf32>
    %8 = vector.broadcast %7 : vector<1x512xf32> to vector<8x512xf32>
    %9 = arith.mulf %6, %8 : vector<8x512xf32>
    %c0_6 = arith.constant 0 : index
    %c0_7 = arith.constant 0 : index
    %10 = vector.load %arg7[%c0_6, %c0_7] : memref<1x512xf32, #tpu.memory_space<vmem>>, vector<1x512xf32>
    %11 = vector.broadcast %10 : vector<1x512xf32> to vector<8x512xf32>
    %12 = arith.addf %9, %11 : vector<8x512xf32>
    %cst_8 = arith.constant 0.000000e+00 : f32
    %13 = vector.broadcast %cst_8 : f32 to vector<8x512xf32>
    %14 = arith.maximumf %12, %13 : vector<8x512xf32>
    %c0_9 = arith.constant 0 : index
    %c0_10 = arith.constant 0 : index
    %c0_11 = arith.constant 0 : index
    %15 = vector.load %arg10[%c0_9, %c0_10, %c0_11] : memref<1x8x128xf32, #tpu.memory_space<vmem>>, vector<1x8x128xf32>
    %16 = arith.truncf %14 : vector<8x512xf32> to vector<8x512xbf16>
    %c0_12 = arith.constant 0 : index
    %c0_13 = arith.constant 0 : index
    %17 = vector.load %arg8[%c0_12, %c0_13] : memref<512x128xbf16, #tpu.memory_space<vmem>>, vector<512x128xbf16>
    %cst_14 = arith.constant dense<0.000000e+00> : vector<8x128xf32>
    %18 = tpu.matmul %16, %17, %cst_14 {dimension_numbers = #tpu.dot_dimension_numbers<[1], [0], [0], [1], [0, 0, 1, 1], [], []>} : vector<8x512xbf16>, vector<512x128xbf16>, vector<8x128xf32> -> vector<8x128xf32>
    %19 = vector.shape_cast %18 : vector<8x128xf32> to vector<1x8x128xf32>
    %20 = arith.addf %15, %19 : vector<1x8x128xf32>
    %c0_15 = arith.constant 0 : index
    %c0_16 = arith.constant 0 : index
    %c0_17 = arith.constant 0 : index
    %21 = vector.load %arg10[%c0_15, %c0_16, %c0_17] : memref<1x8x128xf32, #tpu.memory_space<vmem>>, vector<1x8x128xf32>
    tpu.vector_store %arg10[%c0_15, %c0_16, %c0_17], %20 {strides = array<i32>} : memref<1x8x128xf32, #tpu.memory_space<vmem>>, vector<1x8x128xf32>,
    return
  }
  func.func @transform_0(%arg0: i32, %arg1: i32) -> (i32, i32) {
    %c0_i32 = arith.constant 0 : i32
    %c0_i32_0 = arith.constant 0 : i32
    %c0_i32_1 = arith.constant 0 : i32
    return %c0_i32, %c0_i32_0 : i32, i32
  }
  func.func @transform_1(%arg0: i32, %arg1: i32) -> (i32, i32) {
    %c0_i32 = arith.constant 0 : i32
    %c0_i32_0 = arith.constant 0 : i32
    %c0_i32_1 = arith.constant 0 : i32
    return %c0_i32, %c0_i32_0 : i32, i32
  }
  func.func @transform_2(%arg0: i32, %arg1: i32) -> (i32, i32) {
    %c0_i32 = arith.constant 0 : i32
    %c0_i32_0 = arith.constant 0 : i32
    %c0_i32_1 = arith.constant 0 : i32
    return %c0_i32, %c0_i32_0 : i32, i32
  }
  func.func @transform_3(%arg0: i32, %arg1: i32) -> (i32, i32) {
    %c1_i32 = arith.constant 1 : i32
    %0 = arith.muli %arg0, %c1_i32 : i32
    %1 = arith.addi %0, %arg1 : i32
    %c0_i32 = arith.constant 0 : i32
    %c0_i32_0 = arith.constant 0 : i32
    return %c0_i32, %1 : i32, i32
  }
  func.func @transform_4(%arg0: i32, %arg1: i32) -> (i32, i32) {
    %c1_i32 = arith.constant 1 : i32
    %0 = arith.muli %arg0, %c1_i32 : i32
    %1 = arith.addi %0, %arg1 : i32
    %c0_i32 = arith.constant 0 : i32
    %c0_i32_0 = arith.constant 0 : i32
    return %c0_i32, %1 : i32, i32
  }
  func.func @transform_5(%arg0: i32, %arg1: i32) -> (i32, i32) {
    %c1_i32 = arith.constant 1 : i32
    %0 = arith.muli %arg0, %c1_i32 : i32
    %1 = arith.addi %0, %arg1 : i32
    %c0_i32 = arith.constant 0 : i32
    %c0_i32_0 = arith.constant 0 : i32
    return %c0_i32, %1 : i32, i32
  }
  func.func @transform_6(%arg0: i32, %arg1: i32) -> (i32, i32) {
    %c1_i32 = arith.constant 1 : i32
    %0 = arith.muli %arg0, %c1_i32 : i32
    %1 = arith.addi %0, %arg1 : i32
    %c0_i32 = arith.constant 0 : i32
    %c0_i32_0 = arith.constant 0 : i32
    return %1, %c0_i32 : i32, i32
  }
  func.func @transform_7(%arg0: i32, %arg1: i32) -> (i32, i32) {
    %c0_i32 = arith.constant 0 : i32
    %c0_i32_0 = arith.constant 0 : i32
    %c0_i32_1 = arith.constant 0 : i32
    return %c0_i32, %c0_i32_0 : i32, i32
  }
  func.func @transform_8(%arg0: i32, %arg1: i32) -> (i32, i32, i32) {
    %c0_i32 = arith.constant 0 : i32
    %c0_i32_0 = arith.constant 0 : i32
    %c0_i32_1 = arith.constant 0 : i32
    return %arg0, %c0_i32, %c0_i32_0 : i32, i32, i32
  }
}

</mosaic_0001>

<llo_original>
// kernel: linear_module_forward.1
$region0: #{linear_module_forward.1}
  #allocation0 [shape = 'u32[]', space=smem, size = 0x4, offset = 0x4, fixed_abs, tag = 'smem constant byte address 0x4 - core index']
  #allocation1 [shape = 'u32[144,128]{1,0:T(1,128)}', space=vmem, size = 0x12000, scoped, tag = 'internal scratch']
  #allocation2 [shape = 'bf16[8,1024]{1,0:T(8,128)(2,1)}', space=vmem, size = 0x4000, scoped, tag = 'scratch operand']
  %s0 = inlined_call_operand.hbm [shape: f32[8,32], index: 0, kind: input, shape index: {}]
  %s1 = inlined_call_operand.hbm [shape: bf16[32,1024], index: 1, kind: input, shape index: {}]
  %s2 = inlined_call_operand.hbm [shape: f32[1,1024], index: 2, kind: input, shape index: {}]
  %s3 = inlined_call_operand.hbm [shape: s8[1024,1024], index: 3, kind: input, shape index: {}]
  %s4 = inlined_call_operand.vmem [shape: f32[1,1024], index: 4, kind: input, shape index: {}]
  %s5 = inlined_call_operand.vmem [shape: f32[1,1024], index: 5, kind: input, shape index: {}]
  %s6 = inlined_call_operand.hbm [shape: bf16[1024,128], index: 6, kind: input, shape index: {}]
  %s7 = inlined_call_operand.vmem [shape: f32[1,128], index: 7, kind: input, shape index: {}]
  %s8 = inlined_call_operand.vmem [shape: f32[2,8,128], index: 8, kind: output, shape index: {}]
  %s9 = sld [smem:[#allocation0]]
  $region89: #{linear_module_forward.1} parent=0
    _
  %s11 = ssub.s32 1, %s9
  %s12 = scalar_select 0, %s11, %s9
  $region1: #{linear_module_forward.1} parent=0
    #allocation3 [shape = 'u8[4096]{0}', space=vmem, size = 0x1000, scoped, tag = 'input window, operand 0, single buffered']
    #allocation4 [shape = 's32[2]{0}', space=sflag, size = 0x8, scoped, tag = 'scoped memory for linear_module_forward.1']
    #allocation5 [shape = 'u8[65536]{0}', space=vmem, size = 0x10000, scoped, tag = 'input window, operand 1, single buffered']
    #allocation6 [shape = 's32[1]{0}', space=sflag, size = 0x4, scoped, tag = 'scoped memory for linear_module_forward.1']
    #allocation7 [shape = 'u8[4096]{0}', space=vmem, size = 0x1000, scoped, tag = 'input window, operand 2, single buffered']
    #allocation8 [shape = 'u8[1048576]{0}', space=vmem, size = 0x100000, scoped, tag = 'input window, operand 3']
    #allocation9 [shape = 's32[2]{0}', space=sflag, size = 0x8, scoped, tag = 'scoped memory for linear_module_forward.1']
    #allocation10 [shape = 'u8[262144]{0}', space=vmem, size = 0x40000, scoped, tag = 'input window, operand 6']
    %13 = vsyncpa [#allocation4], 0
    %14 = vsyncpa [#allocation6], 0
    %15 = vsyncpa [#allocation9], 0
    %s16 = scalar_lea.sflag [#allocation9], 1
    %17 = vsyncpa %s16, 0
    loop: start=0, step=1, limit=4
    $region2: #{linear_module_forward.1} parent=1 // loop_pre_header
      _
    $region3: #{linear_module_forward.1} parent=1 // loop_header
      %s19 = sphi 0, %s23
      %p20 = scmp.ge.s32.totalorder %s19, 4
      %s26 = sphi 0, %s38
      %s27 = sphi 0, %s34
      %s28 = sphi 0, %s26
      %s29 = sphi 0, %s27
      %s30 = sphi 0, %s28
      %s31 = sphi 0, %s29
      %s39 = sphi 0, %s39
      %s41 = sphi 0, %s39
      %s42 = sphi 0, %s41
      %s56 = sphi 0, %s42
      %s60 = sphi 0, %s60
      %s62 = sphi 0, %s60
      %s63 = sphi 0, %s62
      %s77 = sphi 0, %s63
      %s81 = sphi 0, %s81
      %s83 = sphi 0, %s81
      %s84 = sphi 0, %s83
      %s98 = sphi 0, %s84
      %s106 = sphi 0, %s108
      %s109 = sphi 0, %s106
      %s110 = sphi 0, %s109
      %s126 = sphi 0, %s110
      %s134 = sphi 0, %s136
      %s137 = sphi 0, %s134
      %s138 = sphi 0, %s137
      %s154 = sphi 0, %s138
      %s162 = sphi 0, %s164
      %s165 = sphi 0, %s162
      %s166 = sphi 0, %s165
      %s182 = sphi 0, %s166
      %s190 = sphi 0, %s192
      %s193 = sphi 0, %s190
      %s194 = sphi 0, %s193
      %s210 = sphi 0, %s194
      %s214 = sphi 0, %s214
      %s216 = sphi 0, %s214
      %s217 = sphi 0, %s216
      %s231 = sphi 0, %s217
      %s237 = sphi 0, %s239
      %s240 = sphi 0, %s237
      %s241 = sphi 0, %s240
      %s257 = sphi 0, %s241
    $region4: #{linear_module_forward.1} parent=1 // loop_header_branch
      %22 = sbr.rel (%p20) target = $region8
    $region5: #{linear_module_forward.1} parent=1 // loop_body
      %s24 = ssub.s32 %s19, 1
      %s25 = ssub.s32 %s19, 2
      %s32 = sadd.s32 1, %s27
      %p33 = scmp.ge.s32.totalorder %s32, 1
      %s34 = scalar_select %p33, 0, %s32
      %s35 = sadd.s32 1, %s26
      %s36 = scalar_select %p33, %s35, %s26
      %p37 = scmp.ge.s32.totalorder %s36, 2
      %s38 = scalar_select %p37, 0, %s36
      %s40 = sadd.s32 %s39, 1
      %p43 = scmp.eq.s32.totalorder %s19, 1
      %p44 = scmp.ne.s32.totalorder %s39, %s41
      %p45 = scmp.eq.s32.totalorder %s19, 0
      %p46 = por %p44, %p45
      %p47 = scmp.ne.s32.totalorder %s39, %s41
      %p48 = scmp.eq.s32.totalorder %s24, 1
      %p49 = por %p47, %p48
      %p50 = scmp.ne.s32.totalorder %s41, %s42
      %p51 = scmp.eq.s32.totalorder %s24, 0
      %p52 = por %p50, %p51
      %p53 = scmp.ne.s32.totalorder %s41, %s42
      %p54 = scmp.eq.s32.totalorder %s25, 1
      %p55 = por %p53, %p54
      %p57 = scmp.ne.s32.totalorder %s42, %s56
      %p58 = scmp.eq.s32.totalorder %s25, 0
      %p59 = por %p57, %p58
      %s61 = sadd.s32 %s60, 1
      %p64 = scmp.eq.s32.totalorder %s19, 1
      %p65 = scmp.ne.s32.totalorder %s60, %s62
      %p66 = scmp.eq.s32.totalorder %s19, 0
      %p67 = por %p65, %p66
      %p68 = scmp.ne.s32.totalorder %s60, %s62
      %p69 = scmp.eq.s32.totalorder %s24, 1
      %p70 = por %p68, %p69
      %p71 = scmp.ne.s32.totalorder %s62, %s63
      %p72 = scmp.eq.s32.totalorder %s24, 0
      %p73 = por %p71, %p72
      %p74 = scmp.ne.s32.totalorder %s62, %s63
      %p75 = scmp.eq.s32.totalorder %s25, 1
      %p76 = por %p74, %p75
      %p78 = scmp.ne.s32.totalorder %s63, %s77
      %p79 = scmp.eq.s32.totalorder %s25, 0
      %p80 = por %p78, %p79
      %s82 = sadd.s32 %s81, 1
      %p85 = scmp.eq.s32.totalorder %s19, 1
      %p86 = scmp.ne.s32.totalorder %s81, %s83
      %p87 = scmp.eq.s32.totalorder %s19, 0
      %p88 = por %p86, %p87
      %p89 = scmp.ne.s32.totalorder %s81, %s83
      %p90 = scmp.eq.s32.totalorder %s24, 1
      %p91 = por %p89, %p90
      %p92 = scmp.ne.s32.totalorder %s83, %s84
      %p93 = scmp.eq.s32.totalorder %s24, 0
      %p94 = por %p92, %p93
      %p95 = scmp.ne.s32.totalorder %s83, %s84
      %p96 = scmp.eq.s32.totalorder %s25, 1
      %p97 = por %p95, %p96
      %p99 = scmp.ne.s32.totalorder %s84, %s98
      %p100 = scmp.eq.s32.totalorder %s25, 0
      %p101 = por %p99, %p100
      %s102 = sadd.s32 %s26, %s27
      %s103 = sadd.s32 %s38, %s34
      %s104 = ssub.s32 %s102, %s103
      %p105 = scmp.eq.s32.totalorder %s104, 0
      %s107 = sadd.s32 %s106, 1
      %s108 = scalar_select %p105, %s106, %s107
      %p111 = pneg %p105
      %p112 = scmp.eq.s32.totalorder %s19, 1
      %p113 = por %p111, %p112
      %p114 = scmp.ne.s32.totalorder %s106, %s109
      %p115 = scmp.eq.s32.totalorder %s19, 0
      %p116 = por %p114, %p115
      %p117 = scmp.ne.s32.totalorder %s106, %s109
      %p118 = scmp.eq.s32.totalorder %s24, 1
      %p119 = por %p117, %p118
      %p120 = scmp.ne.s32.totalorder %s109, %s110
      %p121 = scmp.eq.s32.totalorder %s24, 0
      %p122 = por %p120, %p121
      %p123 = scmp.ne.s32.totalorder %s109, %s110
      %p124 = scmp.eq.s32.totalorder %s25, 1
      %p125 = por %p123, %p124
      %p127 = scmp.ne.s32.totalorder %s110, %s126
      %p128 = scmp.eq.s32.totalorder %s25, 0
      %p129 = por %p127, %p128
      %s130 = sadd.s32 %s26, %s27
      %s131 = sadd.s32 %s38, %s34
      %s132 = ssub.s32 %s130, %s131
      %p133 = scmp.eq.s32.totalorder %s132, 0
      %s135 = sadd.s32 %s134, 1
      %s136 = scalar_select %p133, %s134, %s135
      %p139 = pneg %p133
      %p140 = scmp.eq.s32.totalorder %s19, 1
      %p141 = por %p139, %p140
      %p142 = scmp.ne.s32.totalorder %s134, %s137
      %p143 = scmp.eq.s32.totalorder %s19, 0
      %p144 = por %p142, %p143
      %p145 = scmp.ne.s32.totalorder %s134, %s137
      %p146 = scmp.eq.s32.totalorder %s24, 1
      %p147 = por %p145, %p146
      %p148 = scmp.ne.s32.totalorder %s137, %s138
      %p149 = scmp.eq.s32.totalorder %s24, 0
      %p150 = por %p148, %p149
      %p151 = scmp.ne.s32.totalorder %s137, %s138
      %p152 = scmp.eq.s32.totalorder %s25, 1
      %p153 = por %p151, %p152
      %p155 = scmp.ne.s32.totalorder %s138, %s154
      %p156 = scmp.eq.s32.totalorder %s25, 0
      %p157 = por %p155, %p156
      %s158 = sadd.s32 %s26, %s27
      %s159 = sadd.s32 %s38, %s34
      %s160 = ssub.s32 %s158, %s159
      %p161 = scmp.eq.s32.totalorder %s160, 0
      %s163 = sadd.s32 %s162, 1
      %s164 = scalar_select %p161, %s162, %s163
      %p167 = pneg %p161
      %p168 = scmp.eq.s32.totalorder %s19, 1
      %p169 = por %p167, %p168
      %p170 = scmp.ne.s32.totalorder %s162, %s165
      %p171 = scmp.eq.s32.totalorder %s19, 0
      %p172 = por %p170, %p171
      %p173 = scmp.ne.s32.totalorder %s162, %s165
      %p174 = scmp.eq.s32.totalorder %s24, 1
      %p175 = por %p173, %p174
      %p176 = scmp.ne.s32.totalorder %s165, %s166
      %p177 = scmp.eq.s32.totalorder %s24, 0
      %p178 = por %p176, %p177
      %p179 = scmp.ne.s32.totalorder %s165, %s166
      %p180 = scmp.eq.s32.totalorder %s25, 1
      %p181 = por %p179, %p180
      %p183 = scmp.ne.s32.totalorder %s166, %s182
      %p184 = scmp.eq.s32.totalorder %s25, 0
      %p185 = por %p183, %p184
      %s186 = sadd.s32 %s26, %s27
      %s187 = sadd.s32 %s38, %s34
      %s188 = ssub.s32 %s186, %s187
      %p189 = scmp.eq.s32.totalorder %s188, 0
      %s191 = sadd.s32 %s190, 1
      %s192 = scalar_select %p189, %s190, %s191
      %p195 = pneg %p189
      %p196 = scmp.eq.s32.totalorder %s19, 1
      %p197 = por %p195, %p196
      %p198 = scmp.ne.s32.totalorder %s190, %s193
      %p199 = scmp.eq.s32.totalorder %s19, 0
      %p200 = por %p198, %p199
      %p201 = scmp.ne.s32.totalorder %s190, %s193
      %p202 = scmp.eq.s32.totalorder %s24, 1
      %p203 = por %p201, %p202
      %p204 = scmp.ne.s32.totalorder %s193, %s194
      %p205 = scmp.eq.s32.totalorder %s24, 0
      %p206 = por %p204, %p205
      %p207 = scmp.ne.s32.totalorder %s193, %s194
      %p208 = scmp.eq.s32.totalorder %s25, 1
      %p209 = por %p207, %p208
      %p211 = scmp.ne.s32.totalorder %s194, %s210
      %p212 = scmp.eq.s32.totalorder %s25, 0
      %p213 = por %p211, %p212
      %s215 = sadd.s32 %s214, 1
      %p218 = scmp.eq.s32.totalorder %s19, 1
      %p219 = scmp.ne.s32.totalorder %s214, %s216
      %p220 = scmp.eq.s32.totalorder %s19, 0
      %p221 = por %p219, %p220
      %p222 = scmp.ne.s32.totalorder %s214, %s216
      %p223 = scmp.eq.s32.totalorder %s24, 1
      %p224 = por %p222, %p223
      %p225 = scmp.ne.s32.totalorder %s216, %s217
      %p226 = scmp.eq.s32.totalorder %s24, 0
      %p227 = por %p225, %p226
      %p228 = scmp.ne.s32.totalorder %s216, %s217
      %p229 = scmp.eq.s32.totalorder %s25, 1
      %p230 = por %p228, %p229
      %p232 = scmp.ne.s32.totalorder %s217, %s231
      %p233 = scmp.eq.s32.totalorder %s25, 0
      %p234 = por %p232, %p233
      %s235 = ssub.s32 %s26, %s38
      %p236 = scmp.eq.s32.totalorder %s235, 0
      %s238 = sadd.s32 %s237, 1
      %s239 = scalar_select %p236, %s237, %s238
      %p242 = pneg %p236
      %p243 = scmp.eq.s32.totalorder %s19, 1
      %p244 = por %p242, %p243
      %p245 = scmp.ne.s32.totalorder %s237, %s240
      %p246 = scmp.eq.s32.totalorder %s19, 0
      %p247 = por %p245, %p246
      %p248 = scmp.ne.s32.totalorder %s237, %s240
      %p249 = scmp.eq.s32.totalorder %s24, 1
      %p250 = por %p248, %p249
      %p251 = scmp.ne.s32.totalorder %s240, %s241
      %p252 = scmp.eq.s32.totalorder %s24, 0
      %p253 = por %p251, %p252
      %p254 = scmp.ne.s32.totalorder %s240, %s241
      %p255 = scmp.eq.s32.totalorder %s25, 1
      %p256 = por %p254, %p255
      %p258 = scmp.ne.s32.totalorder %s241, %s257
      %p259 = scmp.eq.s32.totalorder %s25, 0
      %p260 = por %p258, %p259
      %p261 = scmp.le.s32.totalorder 1, %s19
      %p262 = scmp.lt.s32.totalorder %s19, 3
      %p263 = pnand %p261, %p262
      %p264 = pneg %p263
      // Predicated region
      $region9: #{linear_module_forward.1} parent=5 // pred_check
        _
      $region10: #{linear_module_forward.1} parent=5 // pred_check_branch
        %266 = sbr.rel (%p263) target = $region12
      $region11: #{linear_module_forward.1} parent=5 // pred_region
        %s267 = ssub.s32 %s19, 1
        // Predicated region
        $region13: #{linear_module_forward.1} parent=11 // pred_check
          %p268 = pneg %p52
        $region14: #{linear_module_forward.1} parent=11 // pred_check_branch
          %270 = sbr.rel (%p268) target = $region16
        $region15: #{linear_module_forward.1} parent=11 // pred_region
          %s272 = ssub.s32 128, 128
          %273 = vsyncadd [#allocation4], %s272
          %s275 = sshll.u32 [#allocation3], 4
          %s276 = int_to_ptr.vmem [resolvable:$true] %s275
          %278 = dma.hbm_to_vmem [thread:$0]  %s0, 128, %s276, [#allocation4]
        $region16: #{linear_module_forward.1} parent=11 // pred_fallthru
          _
        // Predicated region
        $region17: #{linear_module_forward.1} parent=11 // pred_check
          %p279 = pneg %p73
        $region18: #{linear_module_forward.1} parent=11 // pred_check_branch
          %281 = sbr.rel (%p279) target = $region20
        $region19: #{linear_module_forward.1} parent=11 // pred_region
          %s283 = ssub.s32 2048, 2048
          %284 = vsyncadd [#allocation6], %s283
          %s285 = sshll.u32 [#allocation5], 4
          %s286 = int_to_ptr.vmem [resolvable:$true] %s285
          %291 = dma.hbm_to_vmem [thread:$0]  %s1, 2048, %s286, [#allocation6], 512, 512, 32
        $region20: #{linear_module_forward.1} parent=11 // pred_fallthru
          _
        // Predicated region
        $region21: #{linear_module_forward.1} parent=11 // pred_check
          %p292 = pneg %p94
        $region22: #{linear_module_forward.1} parent=11 // pred_check_branch
          %294 = sbr.rel (%p292) target = $region24
        $region23: #{linear_module_forward.1} parent=11 // pred_region
          %s296 = ssub.s32 128, 128
          %297 = vsyncadd [#allocation6], %s296
          %s299 = sshll.u32 [#allocation7], 4
          %s300 = int_to_ptr.vmem [resolvable:$true] %s299
          %302 = dma.hbm_to_vmem [thread:$0]  %s2, 128, %s300, [#allocation6]
        $region24: #{linear_module_forward.1} parent=11 // pred_fallthru
          _
        // Predicated region
        $region25: #{linear_module_forward.1} parent=11 // pred_check
          %p303 = pneg %p227
        $region26: #{linear_module_forward.1} parent=11 // pred_check_branch
          %305 = sbr.rel (%p303) target = $region28
        $region27: #{linear_module_forward.1} parent=11 // pred_region
          _
        $region28: #{linear_module_forward.1} parent=11 // pred_fallthru
          _
      $region12: #{linear_module_forward.1} parent=5 // pred_fallthru
        _
      %p306 = scmp.lt.s32.totalorder %s19, 2
      // Predicated region
      $region29: #{linear_module_forward.1} parent=5 // pred_check
        %p307 = pneg %p306
      $region30: #{linear_module_forward.1} parent=5 // pred_check_branch
        %309 = sbr.rel (%p307) target = $region32
      $region31: #{linear_module_forward.1} parent=5 // pred_region
        // Predicated region
        $region33: #{linear_module_forward.1} parent=31 // pred_check
          %p310 = pneg %p116
        $region34: #{linear_module_forward.1} parent=31 // pred_check_branch
          %312 = sbr.rel (%p310) target = $region36
        $region35: #{linear_module_forward.1} parent=31 // pred_region
          %s313 = sand.u32 %s19, 1
          %s314 = scalar_lea.sflag [#allocation9], %s313
          %s315 = sand.u32 %s106, 1
          %s316 = smul.addr %s315, 1024
          %s317 = scalar_lea.vmem [#allocation8], %s316
          %s318 = sadd.s32 %s26, %s27
          %s319 = smul.u32 4, %s318
          %s321 = ssub.s32 16384, 16384
          %322 = vsyncadd %s314, %s321
          %s323 = smul.addr %s319, 128
          %s324 = scalar_lea.hbm %s3, %s323
          %s325 = sshll.u32 %s317, 4
          %s326 = int_to_ptr.vmem [resolvable:$true] %s325
          %331 = dma.hbm_to_vmem [thread:$0]  %s324, 16384, %s326, %s314, 1024, 512, 32
        $region36: #{linear_module_forward.1} parent=31 // pred_fallthru
          _
        // Predicated region
        $region37: #{linear_module_forward.1} parent=31 // pred_check
          %p332 = pneg %p144
        $region38: #{linear_module_forward.1} parent=31 // pred_check_branch
          %334 = sbr.rel (%p332) target = $region40
        $region39: #{linear_module_forward.1} parent=31 // pred_region
          %s335 = sadd.s32 %s26, %s27
          %s336 = smul.u32 4, %s335
          %p337 = scmp.lt.s32.totalorder %s336, 7
          %s338 = scalar_select %p337, %s336, 7
          %s339 = scalar_lea.vmem %s4, %s338
          %s340 = sadd.s32 %s26, %s27
          %s341 = smul.u32 4, %s340
        $region40: #{linear_module_forward.1} parent=31 // pred_fallthru
          _
        // Predicated region
        $region41: #{linear_module_forward.1} parent=31 // pred_check
          %p342 = pneg %p172
        $region42: #{linear_module_forward.1} parent=31 // pred_check_branch
          %344 = sbr.rel (%p342) target = $region44
        $region43: #{linear_module_forward.1} parent=31 // pred_region
          %s345 = sadd.s32 %s26, %s27
          %s346 = smul.u32 4, %s345
          %p347 = scmp.lt.s32.totalorder %s346, 7
          %s348 = scalar_select %p347, %s346, 7
          %s349 = scalar_lea.vmem %s5, %s348
          %s350 = sadd.s32 %s26, %s27
          %s351 = smul.u32 4, %s350
        $region44: #{linear_module_forward.1} parent=31 // pred_fallthru
          _
        // Predicated region
        $region45: #{linear_module_forward.1} parent=31 // pred_check
          %p352 = pneg %p200
        $region46: #{linear_module_forward.1} parent=31 // pred_check_branch
          %354 = sbr.rel (%p352) target = $region48
        $region47: #{linear_module_forward.1} parent=31 // pred_region
          %s355 = sand.u32 %s19, 1
          %s356 = scalar_lea.sflag [#allocation9], %s355
          %s357 = sand.u32 %s190, 1
          %s358 = smul.addr %s357, 256
          %s359 = scalar_lea.vmem [#allocation10], %s358
          %s360 = sadd.s32 %s26, %s27
          %s361 = smul.u32 64, %s360
          %s363 = ssub.s32 4096, 4096
          %364 = vsyncadd %s356, %s363
          %s365 = smul.addr %s361, 64
          %s366 = scalar_lea.hbm %s6, %s365
          %s367 = sshll.u32 %s359, 4
          %s368 = int_to_ptr.vmem [resolvable:$true] %s367
          %373 = dma.hbm_to_vmem [thread:$0]  %s366, 4096, %s368, %s356, 64, 64, 4
        $region48: #{linear_module_forward.1} parent=31 // pred_fallthru
          _
      $region32: #{linear_module_forward.1} parent=5 // pred_fallthru
        _
      %p374 = scmp.le.s32.totalorder 1, %s19
      %p375 = scmp.lt.s32.totalorder %s19, 3
      %p376 = pnand %p374, %p375
      %p377 = pneg %p376
      // Predicated region
      $region49: #{linear_module_forward.1} parent=5 // pred_check
        _
      $region50: #{linear_module_forward.1} parent=5 // pred_check_branch
        %379 = sbr.rel (%p376) target = $region52
      $region51: #{linear_module_forward.1} parent=5 // pred_region
        %s380 = ssub.s32 %s19, 1
        // Predicated region
        $region53: #{linear_module_forward.1} parent=51 // pred_check
          %p381 = pneg %p52
        $region54: #{linear_module_forward.1} parent=51 // pred_check_branch
          %383 = sbr.rel (%p381) target = $region56
        $region55: #{linear_module_forward.1} parent=51 // pred_region
          %384 = dma.done [#allocation4], 128
        $region56: #{linear_module_forward.1} parent=51 // pred_fallthru
          _
        // Predicated region
        $region57: #{linear_module_forward.1} parent=51 // pred_check
          %p385 = pneg %p73
        $region58: #{linear_module_forward.1} parent=51 // pred_check_branch
          %387 = sbr.rel (%p385) target = $region60
        $region59: #{linear_module_forward.1} parent=51 // pred_region
          %388 = dma.done [#allocation6], 2048
        $region60: #{linear_module_forward.1} parent=51 // pred_fallthru
          _
        // Predicated region
        $region61: #{linear_module_forward.1} parent=51 // pred_check
          %p389 = pneg %p94
        $region62: #{linear_module_forward.1} parent=51 // pred_check_branch
          %391 = sbr.rel (%p389) target = $region64
        $region63: #{linear_module_forward.1} parent=51 // pred_region
          %392 = dma.done [#allocation6], 128
        $region64: #{linear_module_forward.1} parent=51 // pred_fallthru
          _
        %s393 = sand.u32 %s24, 1
        %s394 = scalar_lea.sflag [#allocation9], %s393
        %s395 = sand.u32 %s109, 1
        %s396 = smul.addr %s395, 1024
        %s397 = scalar_lea.vmem [#allocation8], %s396
        // Predicated region
        $region65: #{linear_module_forward.1} parent=51 // pred_check
          %p398 = pneg %p122
        $region66: #{linear_module_forward.1} parent=51 // pred_check_branch
          %400 = sbr.rel (%p398) target = $region68
        $region67: #{linear_module_forward.1} parent=51 // pred_region
          %401 = dma.done %s394, 16384
        $region68: #{linear_module_forward.1} parent=51 // pred_fallthru
          _
        %s402 = sand.u32 %s24, 1
        %s403 = scalar_lea.sflag [#allocation9], %s402
        %s404 = sand.u32 %s193, 1
        %s405 = smul.addr %s404, 256
        %s406 = scalar_lea.vmem [#allocation10], %s405
        // Predicated region
        $region69: #{linear_module_forward.1} parent=51 // pred_check
          %p407 = pneg %p206
        $region70: #{linear_module_forward.1} parent=51 // pred_check_branch
          %409 = sbr.rel (%p407) target = $region72
        $region71: #{linear_module_forward.1} parent=51 // pred_region
          %410 = dma.done %s403, 4096
        $region72: #{linear_module_forward.1} parent=51 // pred_fallthru
          _
        %p411 = pneg %p52
        %p412 = pneg %p49
        %p413 = pneg %p73
        %p414 = pneg %p70
        %p415 = pneg %p94
        %p416 = pneg %p91
        %s417 = sand.u32 %s24, 1
        %s418 = scalar_lea.sflag [#allocation9], %s417
        %s419 = sand.u32 %s109, 1
        %s420 = smul.addr %s419, 1024
        %s421 = scalar_lea.vmem [#allocation8], %s420
        %p422 = pneg %p122
        %p423 = pneg %p119
        %s424 = sadd.s32 %s28, %s29
        %s425 = smul.u32 4, %s424
        %p426 = scmp.lt.s32.totalorder %s425, 7
        %s427 = scalar_select %p426, %s425, 7
        %s428 = scalar_lea.vmem %s4, %s427
        %p429 = pneg %p150
        %p430 = pneg %p147
        %s431 = sadd.s32 %s28, %s29
        %s432 = smul.u32 4, %s431
        %p433 = scmp.lt.s32.totalorder %s432, 7
        %s434 = scalar_select %p433, %s432, 7
        %s435 = scalar_lea.vmem %s5, %s434
        %p436 = pneg %p178
        %p437 = pneg %p175
        %s438 = sand.u32 %s24, 1
        %s439 = scalar_lea.sflag [#allocation9], %s438
        %s440 = sand.u32 %s193, 1
        %s441 = smul.addr %s440, 256
        %s442 = scalar_lea.vmem [#allocation10], %s441
        %p443 = pneg %p206
        %p444 = pneg %p203
        %p445 = pneg %p227
        %p446 = pneg %p224
        %p447 = pneg %p253
        %p448 = pneg %p250
        %p449 = scmp.lt.s32.totalorder %s28, 1
        %s450 = scalar_select %p449, %s28, 1
        %s451 = smul.addr %s450, 8
        %s452 = scalar_lea.vmem %s8, %s451
        %s453 = sadd.s32 %s28, %s29
        %s454 = smul.u32 4, %s453
        %s455 = sadd.s32 %s28, %s29
        %s456 = smul.u32 4, %s455
        %p457 = scmp.lt.s32.totalorder %s456, 7
        %s458 = scalar_select %p457, %s456, 7
        %s459 = scalar_lea.vmem %s4, %s458
        %s460 = sadd.s32 %s28, %s29
        %s461 = smul.u32 4, %s460
        %s462 = sadd.s32 %s28, %s29
        %s463 = smul.u32 4, %s462
        %p464 = scmp.lt.s32.totalorder %s463, 7
        %s465 = scalar_select %p464, %s463, 7
        %s466 = scalar_lea.vmem %s5, %s465
        %s467 = sadd.s32 %s28, %s29
        %s468 = smul.u32 4, %s467
        %s469 = sadd.s32 %s28, %s29
        %s470 = smul.u32 64, %s469
        %p471 = scmp.lt.s32.totalorder %s28, 1
        %s472 = scalar_select %p471, %s28, 1
        %s473 = smul.addr %s472, 8
        %s474 = scalar_lea.vmem %s8, %s473
        %p476 = scmp.eq.s32.totalorder %s29, 0
        // Predicated region
        $region73: #{linear_module_forward.1} parent=51 // pred_check
          %p477 = pneg %p476
        $region74: #{linear_module_forward.1} parent=51 // pred_check_branch
          %479 = sbr.rel (%p477) target = $region76
        $region75: #{linear_module_forward.1} parent=51 // pred_region
          %v480 = vld [vmem:[#allocation3] sm:$0xff]
          %v481 = vpack.c.bf16 %v480, %v480
          %v482 = vld [vmem:[#allocation5] sm:$0xff]
          %v483 = vld [vmem:[#allocation5 + $0x8] sm:$0xff]
          %v484 = vld [vmem:[#allocation5 + $0x10] sm:$0xff]
          %v485 = vld [vmem:[#allocation5 + $0x18] sm:$0xff]
          %v486 = vld [vmem:[#allocation5 + $0x20] sm:$0xff]
          %v487 = vld [vmem:[#allocation5 + $0x28] sm:$0xff]
          %v488 = vld [vmem:[#allocation5 + $0x30] sm:$0xff]
          %v489 = vld [vmem:[#allocation5 + $0x38] sm:$0xff]
          %v490 = vld [vmem:[#allocation5 + $0x40] sm:$0xff]
          %v491 = vld [vmem:[#allocation5 + $0x48] sm:$0xff]
          %v492 = vld [vmem:[#allocation5 + $0x50] sm:$0xff]
          %v493 = vld [vmem:[#allocation5 + $0x58] sm:$0xff]
          %v494 = vld [vmem:[#allocation5 + $0x60] sm:$0xff]
          %v495 = vld [vmem:[#allocation5 + $0x68] sm:$0xff]
          %v496 = vld [vmem:[#allocation5 + $0x70] sm:$0xff]
          %v497 = vld [vmem:[#allocation5 + $0x78] sm:$0xff]
          %v498 = vld [vmem:[#allocation7] sm:$0xff]
          %v500 = vlaneseq
          %v501 = vshrl.u32 %v500, 7
          %v502 = vsub.s32 0, %v501
          %v503 = vrot.slane %v498, %v502
          %v504 = vlaneseq
          %v505 = vshrl.u32 %v504, 7
          %v506 = vsub.s32 1, %v505
          %v507 = vrot.slane %v498, %v506
          %v508 = vlaneseq
          %v509 = vshrl.u32 %v508, 7
          %v510 = vsub.s32 2, %v509
          %v511 = vrot.slane %v498, %v510
          %v512 = vlaneseq
          %v513 = vshrl.u32 %v512, 7
          %v514 = vsub.s32 3, %v513
          %v515 = vrot.slane %v498, %v514
          %v516 = vlaneseq
          %v517 = vshrl.u32 %v516, 7
          %v518 = vsub.s32 4, %v517
          %v519 = vrot.slane %v498, %v518
          %v520 = vlaneseq
          %v521 = vshrl.u32 %v520, 7
          %v522 = vsub.s32 5, %v521
          %v523 = vrot.slane %v498, %v522
          %v524 = vlaneseq
          %v525 = vshrl.u32 %v524, 7
          %v526 = vsub.s32 6, %v525
          %v527 = vrot.slane %v498, %v526
          %v528 = vlaneseq
          %v529 = vshrl.u32 %v528, 7
          %v530 = vsub.s32 7, %v529
          %v531 = vrot.slane %v498, %v530
          %v556 = vunpack.c.l.b16 %v482
          %v557 = vunpack.c.h.b16 %v482
          %v558 = vunpack.c.l.b16 %v483
          %v559 = vunpack.c.h.b16 %v483
          %v560 = vunpack.c.l.b16 %v484
          %v561 = vunpack.c.h.b16 %v484
          %v562 = vunpack.c.l.b16 %v485
          %v563 = vunpack.c.h.b16 %v485
          %v564 = vunpack.c.l.b16 %v486
          %v565 = vunpack.c.h.b16 %v486
          %v566 = vunpack.c.l.b16 %v487
          %v567 = vunpack.c.h.b16 %v487
          %v568 = vunpack.c.l.b16 %v488
          %v569 = vunpack.c.h.b16 %v488
          %v570 = vunpack.c.l.b16 %v489
          %v571 = vunpack.c.h.b16 %v489
          %v572 = vunpack.c.l.b16 %v490
          %v573 = vunpack.c.h.b16 %v490
          %v574 = vunpack.c.l.b16 %v491
          %v575 = vunpack.c.h.b16 %v491
          %v576 = vunpack.c.l.b16 %v492
          %v577 = vunpack.c.h.b16 %v492
          %v578 = vunpack.c.l.b16 %v493
          %v579 = vunpack.c.h.b16 %v493
          %v580 = vunpack.c.l.b16 %v494
          %v581 = vunpack.c.h.b16 %v494
          %v582 = vunpack.c.l.b16 %v495
          %v583 = vunpack.c.h.b16 %v495
          %v584 = vunpack.c.l.b16 %v496
          %v585 = vunpack.c.h.b16 %v496
          %v586 = vunpack.c.l.b16 %v497
          %v587 = vunpack.c.h.b16 %v497
          %v588 = vpack.c.b16 %v564, %v556
          %v589 = vpack.c.b16 %v565, %v557
          %v590 = vpack.c.b16 %v566, %v558
          %v591 = vpack.c.b16 %v567, %v559
          %v592 = vpack.c.b16 %v568, %v560
          %v593 = vpack.c.b16 %v569, %v561
          %v594 = vpack.c.b16 %v570, %v562
          %v595 = vpack.c.b16 %v571, %v563
          %v596 = vpack.c.b16 %v580, %v572
          %v597 = vpack.c.b16 %v581, %v573
          %v598 = vpack.c.b16 %v582, %v574
          %v599 = vpack.c.b16 %v583, %v575
          %v600 = vpack.c.b16 %v584, %v576
          %v601 = vpack.c.b16 %v585, %v577
          %v602 = vpack.c.b16 %v586, %v578
          %v603 = vpack.c.b16 %v587, %v579
          %vm620 = vcmask 261120
          %v622 = vsel %vm620, %v481, 0
          %624 = vmatprep.subr.bf16.mxu0 %v589
          %625 = vmatpush1.bf16.msra.mxu0 %v588
          %626 = vmatprep.subr.bf16.mxu0 %v597
          %627 = vmatpush1.bf16.msra.mxu0 %v596
          %628 = vmatprep.subr.bf16.mxu0 0
          %629 = vmatpush1.bf16.msra.mxu0 0
          %630 = vmatprep.subr.bf16.mxu0 0
          %631 = vmatpush1.bf16.msra.mxu0 0
          %632 = vmatprep.subr.bf16.mxu0 0
          %633 = vmatpush1.bf16.msra.mxu0 0
          %634 = vmatprep.subr.bf16.mxu0 0
          %635 = vmatpush1.bf16.msra.mxu0 0
          %636 = vmatprep.subr.bf16.mxu0 0
          %637 = vmatpush1.bf16.msra.mxu0 0
          %638 = vmatprep.subr.bf16.mxu0 0
          %639 = vmatpush1.bf16.msra.mxu0 0
          %640 = vmatprep.subr.bf16.mxu0 0
          %641 = vmatpush1.bf16.msra.mxu0 0
          %642 = vmatprep.subr.bf16.mxu0 0
          %643 = vmatpush1.bf16.msra.mxu0 0
          %644 = vmatprep.subr.bf16.mxu0 0
          %645 = vmatpush1.bf16.msra.mxu0 0
          %646 = vmatprep.subr.bf16.mxu0 0
          %647 = vmatpush1.bf16.msra.mxu0 0
          %648 = vmatprep.subr.bf16.mxu0 0
          %649 = vmatpush1.bf16.msra.mxu0 0
          %650 = vmatprep.subr.bf16.mxu0 0
          %651 = vmatpush1.bf16.msra.mxu0 0
          %652 = vmatprep.subr.bf16.mxu0 0
          %653 = vmatpush1.bf16.msra.mxu0 0
          %654 = vmatprep.subr.bf16.mxu0 0
          %655 = vmatpush1.bf16.msra.mxu0 0
          %656 = vmatprep.mubr.bf16.mxu0 0
          %657 = vmatmul.mubr.bf16.gmra.mrb[0].mxu0 %v622
          %v658 = vpop.f32.mrb[0].mxu0
          %v659 = vadd.f32 %v503, %v658
          %v660 = vpop.f32.mrb[0].mxu0
          %v661 = vadd.f32 %v507, %v660
          %v662 = vpop.f32.mrb[0].mxu0
          %v663 = vpop.f32.mrb[0].mxu0
          %664 = vdwg.mxu0
          %665 = vmatprep.subr.bf16.mxu0 %v591
          %666 = vmatpush1.bf16.msra.mxu0 %v590
          %667 = vmatprep.subr.bf16.mxu0 %v599
          %668 = vmatpush1.bf16.msra.mxu0 %v598
          %669 = vmatprep.subr.bf16.mxu0 0
          %670 = vmatpush1.bf16.msra.mxu0 0
          %671 = vmatprep.subr.bf16.mxu0 0
          %672 = vmatpush1.bf16.msra.mxu0 0
          %673 = vmatprep.subr.bf16.mxu0 0
          %674 = vmatpush1.bf16.msra.mxu0 0
          %675 = vmatprep.subr.bf16.mxu0 0
          %676 = vmatpush1.bf16.msra.mxu0 0
          %677 = vmatprep.subr.bf16.mxu0 0
          %678 = vmatpush1.bf16.msra.mxu0 0
          %679 = vmatprep.subr.bf16.mxu0 0
          %680 = vmatpush1.bf16.msra.mxu0 0
          %681 = vmatprep.subr.bf16.mxu0 0
          %682 = vmatpush1.bf16.msra.mxu0 0
          %683 = vmatprep.subr.bf16.mxu0 0
          %684 = vmatpush1.bf16.msra.mxu0 0
          %685 = vmatprep.subr.bf16.mxu0 0
          %686 = vmatpush1.bf16.msra.mxu0 0
          %687 = vmatprep.subr.bf16.mxu0 0
          %688 = vmatpush1.bf16.msra.mxu0 0
          %689 = vmatprep.subr.bf16.mxu0 0
          %690 = vmatpush1.bf16.msra.mxu0 0
          %691 = vmatprep.subr.bf16.mxu0 0
          %692 = vmatpush1.bf16.msra.mxu0 0
          %693 = vmatprep.subr.bf16.mxu0 0
          %694 = vmatpush1.bf16.msra.mxu0 0
          %695 = vmatprep.subr.bf16.mxu0 0
          %696 = vmatpush1.bf16.msra.mxu0 0
          %697 = vmatprep.mubr.bf16.mxu0 0
          %698 = vmatmul.mubr.bf16.gmra.mrb[0].mxu0 %v622
          %v699 = vpop.f32.mrb[0].mxu0
          %v700 = vadd.f32 %v511, %v699
          %v701 = vpop.f32.mrb[0].mxu0
          %v702 = vadd.f32 %v515, %v701
          %v703 = vpop.f32.mrb[0].mxu0
          %v704 = vpop.f32.mrb[0].mxu0
          %705 = vdwg.mxu0
          %706 = vmatprep.subr.bf16.mxu0 %v593
          %707 = vmatpush1.bf16.msra.mxu0 %v592
          %708 = vmatprep.subr.bf16.mxu0 %v601
          %709 = vmatpush1.bf16.msra.mxu0 %v600
          %710 = vmatprep.subr.bf16.mxu0 0
          %711 = vmatpush1.bf16.msra.mxu0 0
          %712 = vmatprep.subr.bf16.mxu0 0
          %713 = vmatpush1.bf16.msra.mxu0 0
          %714 = vmatprep.subr.bf16.mxu0 0
          %715 = vmatpush1.bf16.msra.mxu0 0
          %716 = vmatprep.subr.bf16.mxu0 0
          %717 = vmatpush1.bf16.msra.mxu0 0
          %718 = vmatprep.subr.bf16.mxu0 0
          %719 = vmatpush1.bf16.msra.mxu0 0
          %720 = vmatprep.subr.bf16.mxu0 0
          %721 = vmatpush1.bf16.msra.mxu0 0
          %722 = vmatprep.subr.bf16.mxu0 0
          %723 = vmatpush1.bf16.msra.mxu0 0
          %724 = vmatprep.subr.bf16.mxu0 0
          %725 = vmatpush1.bf16.msra.mxu0 0
          %726 = vmatprep.subr.bf16.mxu0 0
          %727 = vmatpush1.bf16.msra.mxu0 0
          %728 = vmatprep.subr.bf16.mxu0 0
          %729 = vmatpush1.bf16.msra.mxu0 0
          %730 = vmatprep.subr.bf16.mxu0 0
          %731 = vmatpush1.bf16.msra.mxu0 0
          %732 = vmatprep.subr.bf16.mxu0 0
          %733 = vmatpush1.bf16.msra.mxu0 0
          %734 = vmatprep.subr.bf16.mxu0 0
          %735 = vmatpush1.bf16.msra.mxu0 0
          %736 = vmatprep.subr.bf16.mxu0 0
          %737 = vmatpush1.bf16.msra.mxu0 0
          %738 = vmatprep.mubr.bf16.mxu0 0
          %739 = vmatmul.mubr.bf16.gmra.mrb[0].mxu0 %v622
          %v740 = vpop.f32.mrb[0].mxu0
          %v741 = vadd.f32 %v519, %v740
          %v742 = vpop.f32.mrb[0].mxu0
          %v743 = vadd.f32 %v523, %v742
          %v744 = vpop.f32.mrb[0].mxu0
          %v745 = vpop.f32.mrb[0].mxu0
          %746 = vdwg.mxu0
          %747 = vmatprep.subr.bf16.mxu0 %v595
          %748 = vmatpush1.bf16.msra.mxu0 %v594
          %749 = vmatprep.subr.bf16.mxu0 %v603
          %750 = vmatpush1.bf16.msra.mxu0 %v602
          %751 = vmatprep.subr.bf16.mxu0 0
          %752 = vmatpush1.bf16.msra.mxu0 0
          %753 = vmatprep.subr.bf16.mxu0 0
          %754 = vmatpush1.bf16.msra.mxu0 0
          %755 = vmatprep.subr.bf16.mxu0 0
          %756 = vmatpush1.bf16.msra.mxu0 0
          %757 = vmatprep.subr.bf16.mxu0 0
          %758 = vmatpush1.bf16.msra.mxu0 0
          %759 = vmatprep.subr.bf16.mxu0 0
          %760 = vmatpush1.bf16.msra.mxu0 0
          %761 = vmatprep.subr.bf16.mxu0 0
          %762 = vmatpush1.bf16.msra.mxu0 0
          %763 = vmatprep.subr.bf16.mxu0 0
          %764 = vmatpush1.bf16.msra.mxu0 0
          %765 = vmatprep.subr.bf16.mxu0 0
          %766 = vmatpush1.bf16.msra.mxu0 0
          %767 = vmatprep.subr.bf16.mxu0 0
          %768 = vmatpush1.bf16.msra.mxu0 0
          %769 = vmatprep.subr.bf16.mxu0 0
          %770 = vmatpush1.bf16.msra.mxu0 0
          %771 = vmatprep.subr.bf16.mxu0 0
          %772 = vmatpush1.bf16.msra.mxu0 0
          %773 = vmatprep.subr.bf16.mxu0 0
          %774 = vmatpush1.bf16.msra.mxu0 0
          %775 = vmatprep.subr.bf16.mxu0 0
          %776 = vmatpush1.bf16.msra.mxu0 0
          %777 = vmatprep.subr.bf16.mxu0 0
          %778 = vmatpush1.bf16.msra.mxu0 0
          %779 = vmatprep.mubr.bf16.mxu0 0
          %780 = vmatmul.mubr.bf16.gmra.mrb[0].mxu0 %v622
          %v781 = vpop.f32.mrb[0].mxu0
          %v782 = vadd.f32 %v527, %v781
          %v783 = vpop.f32.mrb[0].mxu0
          %v784 = vadd.f32 %v531, %v783
          %v785 = vpop.f32.mrb[0].mxu0
          %v786 = vpop.f32.mrb[0].mxu0
          %787 = vdwg.mxu0
          %v788 = vmax.f32 %v659, 0.0
          %v789 = vmax.f32 %v661, 0.0
          %v790 = vmax.f32 %v700, 0.0
          %v791 = vmax.f32 %v702, 0.0
          %v792 = vmax.f32 %v741, 0.0
          %v793 = vmax.f32 %v743, 0.0
          %v794 = vmax.f32 %v782, 0.0
          %v795 = vmax.f32 %v784, 0.0
          %v796 = vpack.c.bf16 %v788, %v788
          %v797 = vpack.c.bf16 %v789, %v789
          %v798 = vpack.c.bf16 %v790, %v790
          %v799 = vpack.c.bf16 %v791, %v791
          %v800 = vpack.c.bf16 %v792, %v792
          %v801 = vpack.c.bf16 %v793, %v793
          %v802 = vpack.c.bf16 %v794, %v794
          %v803 = vpack.c.bf16 %v795, %v795
          %v812 = vunpack.c.l.b16 %v796
          %v813 = vunpack.c.l.b16 %v797
          %v814 = vunpack.c.l.b16 %v798
          %v815 = vunpack.c.l.b16 %v799
          %v816 = vunpack.c.l.b16 %v800
          %v817 = vunpack.c.l.b16 %v801
          %v818 = vunpack.c.l.b16 %v802
          %v819 = vunpack.c.l.b16 %v803
          %v820 = vpack.c.b16 %v813, %v812
          %v821 = vpack.c.b16 %v815, %v814
          %v822 = vpack.c.b16 %v817, %v816
          %v823 = vpack.c.b16 %v819, %v818
          %828 = vst [vmem:[#allocation2] sm:$0xff] %v820
          %829 = vst [vmem:[#allocation2 + $0x8] sm:$0xff] %v821
          %830 = vst [vmem:[#allocation2 + $0x10] sm:$0xff] %v822
          %831 = vst [vmem:[#allocation2 + $0x18] sm:$0xff] %v823
          %p832 = scmp.eq.s32.totalorder %s28, 0
          %v833 = vld [vmem:[%s7] sm:$0x1]
          %s834 = scalar_select %p832, 1, 0
          %v835 = vstv %s834
          %vm836 = vcmp.eq.s32.totalorder %v835, 1
          %v837 = vsel %vm836, %v833, 0.0
          %v839 = vlaneseq
          %v840 = vshrl.u32 %v839, 7
          %v841 = vsub.s32 0, %v840
          %v842 = vrot.slane %v837, %v841
          %844 = vst [vmem:[%s474] sm:$0xff] %v842
        $region76: #{linear_module_forward.1} parent=51 // pred_fallthru
          _
        %v845 = vld [vmem:[#allocation2] sm:$0xff]
        %v846 = vld [vmem:[#allocation2 + $0x8] sm:$0xff]
        %v847 = vld [vmem:[#allocation2 + $0x10] sm:$0xff]
        %v848 = vld [vmem:[#allocation2 + $0x18] sm:$0xff]
        %v849 = vld [vmem:[%s397] sm:$0xff]
        %v850 = vld [vmem:[%s397 + $0x8] sm:$0xff]
        %v851 = vld [vmem:[%s397 + $0x10] sm:$0xff]
        %v852 = vld [vmem:[%s397 + $0x18] sm:$0xff]
        %v853 = vld [vmem:[%s397 + $0x20] sm:$0xff]
        %v854 = vld [vmem:[%s397 + $0x28] sm:$0xff]
        %v855 = vld [vmem:[%s397 + $0x30] sm:$0xff]
        %v856 = vld [vmem:[%s397 + $0x38] sm:$0xff]
        %v857 = vld [vmem:[%s397 + $0x40] sm:$0xff]
        %v858 = vld [vmem:[%s397 + $0x48] sm:$0xff]
        %v859 = vld [vmem:[%s397 + $0x50] sm:$0xff]
        %v860 = vld [vmem:[%s397 + $0x58] sm:$0xff]
        %v861 = vld [vmem:[%s397 + $0x60] sm:$0xff]
        %v862 = vld [vmem:[%s397 + $0x68] sm:$0xff]
        %v863 = vld [vmem:[%s397 + $0x70] sm:$0xff]
        %v864 = vld [vmem:[%s397 + $0x78] sm:$0xff]
        %v865 = vld [vmem:[%s397 + $0x80] sm:$0xff]
        %v866 = vld [vmem:[%s397 + $0x88] sm:$0xff]
        %v867 = vld [vmem:[%s397 + $0x90] sm:$0xff]
        %v868 = vld [vmem:[%s397 + $0x98] sm:$0xff]
        %v869 = vld [vmem:[%s397 + $0xa0] sm:$0xff]
        %v870 = vld [vmem:[%s397 + $0xa8] sm:$0xff]
        %v871 = vld [vmem:[%s397 + $0xb0] sm:$0xff]
        %v872 = vld [vmem:[%s397 + $0xb8] sm:$0xff]
        %v873 = vld [vmem:[%s397 + $0xc0] sm:$0xff]
        %v874 = vld [vmem:[%s397 + $0xc8] sm:$0xff]
        %v875 = vld [vmem:[%s397 + $0xd0] sm:$0xff]
        %v876 = vld [vmem:[%s397 + $0xd8] sm:$0xff]
        %v877 = vld [vmem:[%s397 + $0xe0] sm:$0xff]
        %v878 = vld [vmem:[%s397 + $0xe8] sm:$0xff]
        %v879 = vld [vmem:[%s397 + $0xf0] sm:$0xff]
        %v880 = vld [vmem:[%s397 + $0xf8] sm:$0xff]
        %v881 = vld [vmem:[%s397 + $0x100] sm:$0xff]
        %v882 = vld [vmem:[%s397 + $0x108] sm:$0xff]
        %v883 = vld [vmem:[%s397 + $0x110] sm:$0xff]
        %v884 = vld [vmem:[%s397 + $0x118] sm:$0xff]
        %v885 = vld [vmem:[%s397 + $0x120] sm:$0xff]
        %v886 = vld [vmem:[%s397 + $0x128] sm:$0xff]
        %v887 = vld [vmem:[%s397 + $0x130] sm:$0xff]
        %v888 = vld [vmem:[%s397 + $0x138] sm:$0xff]
        %v889 = vld [vmem:[%s397 + $0x140] sm:$0xff]
        %v890 = vld [vmem:[%s397 + $0x148] sm:$0xff]
        %v891 = vld [vmem:[%s397 + $0x150] sm:$0xff]
        %v892 = vld [vmem:[%s397 + $0x158] sm:$0xff]
        %v893 = vld [vmem:[%s397 + $0x160] sm:$0xff]
        %v894 = vld [vmem:[%s397 + $0x168] sm:$0xff]
        %v895 = vld [vmem:[%s397 + $0x170] sm:$0xff]
        %v896 = vld [vmem:[%s397 + $0x178] sm:$0xff]
        %v897 = vld [vmem:[%s397 + $0x180] sm:$0xff]
        %v898 = vld [vmem:[%s397 + $0x188] sm:$0xff]
        %v899 = vld [vmem:[%s397 + $0x190] sm:$0xff]
        %v900 = vld [vmem:[%s397 + $0x198] sm:$0xff]
        %v901 = vld [vmem:[%s397 + $0x1a0] sm:$0xff]
        %v902 = vld [vmem:[%s397 + $0x1a8] sm:$0xff]
        %v903 = vld [vmem:[%s397 + $0x1b0] sm:$0xff]
        %v904 = vld [vmem:[%s397 + $0x1b8] sm:$0xff]
        %v905 = vld [vmem:[%s397 + $0x1c0] sm:$0xff]
        %v906 = vld [vmem:[%s397 + $0x1c8] sm:$0xff]
        %v907 = vld [vmem:[%s397 + $0x1d0] sm:$0xff]
        %v908 = vld [vmem:[%s397 + $0x1d8] sm:$0xff]
        %v909 = vld [vmem:[%s397 + $0x1e0] sm:$0xff]
        %v910 = vld [vmem:[%s397 + $0x1e8] sm:$0xff]
        %v911 = vld [vmem:[%s397 + $0x1f0] sm:$0xff]
        %v912 = vld [vmem:[%s397 + $0x1f8] sm:$0xff]
        %v913 = vld [vmem:[%s397 + $0x200] sm:$0xff]
        %v914 = vld [vmem:[%s397 + $0x208] sm:$0xff]
        %v915 = vld [vmem:[%s397 + $0x210] sm:$0xff]
        %v916 = vld [vmem:[%s397 + $0x218] sm:$0xff]
        %v917 = vld [vmem:[%s397 + $0x220] sm:$0xff]
        %v918 = vld [vmem:[%s397 + $0x228] sm:$0xff]
        %v919 = vld [vmem:[%s397 + $0x230] sm:$0xff]
        %v920 = vld [vmem:[%s397 + $0x238] sm:$0xff]
        %v921 = vld [vmem:[%s397 + $0x240] sm:$0xff]
        %v922 = vld [vmem:[%s397 + $0x248] sm:$0xff]
        %v923 = vld [vmem:[%s397 + $0x250] sm:$0xff]
        %v924 = vld [vmem:[%s397 + $0x258] sm:$0xff]
        %v925 = vld [vmem:[%s397 + $0x260] sm:$0xff]
        %v926 = vld [vmem:[%s397 + $0x268] sm:$0xff]
        %v927 = vld [vmem:[%s397 + $0x270] sm:$0xff]
        %v928 = vld [vmem:[%s397 + $0x278] sm:$0xff]
        %v929 = vld [vmem:[%s397 + $0x280] sm:$0xff]
        %v930 = vld [vmem:[%s397 + $0x288] sm:$0xff]
        %v931 = vld [vmem:[%s397 + $0x290] sm:$0xff]
        %v932 = vld [vmem:[%s397 + $0x298] sm:$0xff]
        %v933 = vld [vmem:[%s397 + $0x2a0] sm:$0xff]
        %v934 = vld [vmem:[%s397 + $0x2a8] sm:$0xff]
        %v935 = vld [vmem:[%s397 + $0x2b0] sm:$0xff]
        %v936 = vld [vmem:[%s397 + $0x2b8] sm:$0xff]
        %v937 = vld [vmem:[%s397 + $0x2c0] sm:$0xff]
        %v938 = vld [vmem:[%s397 + $0x2c8] sm:$0xff]
        %v939 = vld [vmem:[%s397 + $0x2d0] sm:$0xff]
        %v940 = vld [vmem:[%s397 + $0x2d8] sm:$0xff]
        %v941 = vld [vmem:[%s397 + $0x2e0] sm:$0xff]
        %v942 = vld [vmem:[%s397 + $0x2e8] sm:$0xff]
        %v943 = vld [vmem:[%s397 + $0x2f0] sm:$0xff]
        %v944 = vld [vmem:[%s397 + $0x2f8] sm:$0xff]
        %v945 = vld [vmem:[%s397 + $0x300] sm:$0xff]
        %v946 = vld [vmem:[%s397 + $0x308] sm:$0xff]
        %v947 = vld [vmem:[%s397 + $0x310] sm:$0xff]
        %v948 = vld [vmem:[%s397 + $0x318] sm:$0xff]
        %v949 = vld [vmem:[%s397 + $0x320] sm:$0xff]
        %v950 = vld [vmem:[%s397 + $0x328] sm:$0xff]
        %v951 = vld [vmem:[%s397 + $0x330] sm:$0xff]
        %v952 = vld [vmem:[%s397 + $0x338] sm:$0xff]
        %v953 = vld [vmem:[%s397 + $0x340] sm:$0xff]
        %v954 = vld [vmem:[%s397 + $0x348] sm:$0xff]
        %v955 = vld [vmem:[%s397 + $0x350] sm:$0xff]
        %v956 = vld [vmem:[%s397 + $0x358] sm:$0xff]
        %v957 = vld [vmem:[%s397 + $0x360] sm:$0xff]
        %v958 = vld [vmem:[%s397 + $0x368] sm:$0xff]
        %v959 = vld [vmem:[%s397 + $0x370] sm:$0xff]
        %v960 = vld [vmem:[%s397 + $0x378] sm:$0xff]
        %v961 = vld [vmem:[%s397 + $0x380] sm:$0xff]
        %v962 = vld [vmem:[%s397 + $0x388] sm:$0xff]
        %v963 = vld [vmem:[%s397 + $0x390] sm:$0xff]
        %v964 = vld [vmem:[%s397 + $0x398] sm:$0xff]
        %v965 = vld [vmem:[%s397 + $0x3a0] sm:$0xff]
        %v966 = vld [vmem:[%s397 + $0x3a8] sm:$0xff]
        %v967 = vld [vmem:[%s397 + $0x3b0] sm:$0xff]
        %v968 = vld [vmem:[%s397 + $0x3b8] sm:$0xff]
        %v969 = vld [vmem:[%s397 + $0x3c0] sm:$0xff]
        %v970 = vld [vmem:[%s397 + $0x3c8] sm:$0xff]
        %v971 = vld [vmem:[%s397 + $0x3d0] sm:$0xff]
        %v972 = vld [vmem:[%s397 + $0x3d8] sm:$0xff]
        %v973 = vld [vmem:[%s397 + $0x3e0] sm:$0xff]
        %v974 = vld [vmem:[%s397 + $0x3e8] sm:$0xff]
        %v975 = vld [vmem:[%s397 + $0x3f0] sm:$0xff]
        %v976 = vld [vmem:[%s397 + $0x3f8] sm:$0xff]
        %v977 = vunpack.c.l.s8.bf16 %v849
        %v978 = vunpack.c.l.s8.bf16 %v850
        %v979 = vunpack.c.l.s8.bf16 %v851
        %v980 = vunpack.c.l.s8.bf16 %v852
        %v981 = vunpack.c.h.s8.bf16 %v849
        %v982 = vunpack.c.h.s8.bf16 %v850
        %v983 = vunpack.c.h.s8.bf16 %v851
        %v984 = vunpack.c.h.s8.bf16 %v852
        %v985 = vunpack.c.l.s8.bf16 %v853
        %v986 = vunpack.c.l.s8.bf16 %v854
        %v987 = vunpack.c.l.s8.bf16 %v855
        %v988 = vunpack.c.l.s8.bf16 %v856
        %v989 = vunpack.c.h.s8.bf16 %v853
        %v990 = vunpack.c.h.s8.bf16 %v854
        %v991 = vunpack.c.h.s8.bf16 %v855
        %v992 = vunpack.c.h.s8.bf16 %v856
        %v993 = vunpack.c.l.s8.bf16 %v857
        %v994 = vunpack.c.l.s8.bf16 %v858
        %v995 = vunpack.c.l.s8.bf16 %v859
        %v996 = vunpack.c.l.s8.bf16 %v860
        %v997 = vunpack.c.h.s8.bf16 %v857
        %v998 = vunpack.c.h.s8.bf16 %v858
        %v999 = vunpack.c.h.s8.bf16 %v859
        %v1000 = vunpack.c.h.s8.bf16 %v860
        %v1001 = vunpack.c.l.s8.bf16 %v861
        %v1002 = vunpack.c.l.s8.bf16 %v862
        %v1003 = vunpack.c.l.s8.bf16 %v863
        %v1004 = vunpack.c.l.s8.bf16 %v864
        %v1005 = vunpack.c.h.s8.bf16 %v861
        %v1006 = vunpack.c.h.s8.bf16 %v862
        %v1007 = vunpack.c.h.s8.bf16 %v863
        %v1008 = vunpack.c.h.s8.bf16 %v864
        %v1009 = vunpack.c.l.s8.bf16 %v865
        %v1010 = vunpack.c.l.s8.bf16 %v866
        %v1011 = vunpack.c.l.s8.bf16 %v867
        %v1012 = vunpack.c.l.s8.bf16 %v868
        %v1013 = vunpack.c.h.s8.bf16 %v865
        %v1014 = vunpack.c.h.s8.bf16 %v866
        %v1015 = vunpack.c.h.s8.bf16 %v867
        %v1016 = vunpack.c.h.s8.bf16 %v868
        %v1017 = vunpack.c.l.s8.bf16 %v869
        %v1018 = vunpack.c.l.s8.bf16 %v870
        %v1019 = vunpack.c.l.s8.bf16 %v871
        %v1020 = vunpack.c.l.s8.bf16 %v872
        %v1021 = vunpack.c.h.s8.bf16 %v869
        %v1022 = vunpack.c.h.s8.bf16 %v870
        %v1023 = vunpack.c.h.s8.bf16 %v871
        %v1024 = vunpack.c.h.s8.bf16 %v872
        %v1025 = vunpack.c.l.s8.bf16 %v873
        %v1026 = vunpack.c.l.s8.bf16 %v874
        %v1027 = vunpack.c.l.s8.bf16 %v875
        %v1028 = vunpack.c.l.s8.bf16 %v876
        %v1029 = vunpack.c.h.s8.bf16 %v873
        %v1030 = vunpack.c.h.s8.bf16 %v874
        %v1031 = vunpack.c.h.s8.bf16 %v875
        %v1032 = vunpack.c.h.s8.bf16 %v876
        %v1033 = vunpack.c.l.s8.bf16 %v877
        %v1034 = vunpack.c.l.s8.bf16 %v878
        %v1035 = vunpack.c.l.s8.bf16 %v879
        %v1036 = vunpack.c.l.s8.bf16 %v880
        %v1037 = vunpack.c.h.s8.bf16 %v877
        %v1038 = vunpack.c.h.s8.bf16 %v878
        %v1039 = vunpack.c.h.s8.bf16 %v879
        %v1040 = vunpack.c.h.s8.bf16 %v880
        %v1041 = vunpack.c.l.s8.bf16 %v881
        %v1042 = vunpack.c.l.s8.bf16 %v882
        %v1043 = vunpack.c.l.s8.bf16 %v883
        %v1044 = vunpack.c.l.s8.bf16 %v884
        %v1045 = vunpack.c.h.s8.bf16 %v881
        %v1046 = vunpack.c.h.s8.bf16 %v882
        %v1047 = vunpack.c.h.s8.bf16 %v883
        %v1048 = vunpack.c.h.s8.bf16 %v884
        %v1049 = vunpack.c.l.s8.bf16 %v885
        %v1050 = vunpack.c.l.s8.bf16 %v886
        %v1051 = vunpack.c.l.s8.bf16 %v887
        %v1052 = vunpack.c.l.s8.bf16 %v888
        %v1053 = vunpack.c.h.s8.bf16 %v885
        %v1054 = vunpack.c.h.s8.bf16 %v886
        %v1055 = vunpack.c.h.s8.bf16 %v887
        %v1056 = vunpack.c.h.s8.bf16 %v888
        %v1057 = vunpack.c.l.s8.bf16 %v889
        %v1058 = vunpack.c.l.s8.bf16 %v890
        %v1059 = vunpack.c.l.s8.bf16 %v891
        %v1060 = vunpack.c.l.s8.bf16 %v892
        %v1061 = vunpack.c.h.s8.bf16 %v889
        %v1062 = vunpack.c.h.s8.bf16 %v890
        %v1063 = vunpack.c.h.s8.bf16 %v891
        %v1064 = vunpack.c.h.s8.bf16 %v892
        %v1065 = vunpack.c.l.s8.bf16 %v893
        %v1066 = vunpack.c.l.s8.bf16 %v894
        %v1067 = vunpack.c.l.s8.bf16 %v895
        %v1068 = vunpack.c.l.s8.bf16 %v896
        %v1069 = vunpack.c.h.s8.bf16 %v893
        %v1070 = vunpack.c.h.s8.bf16 %v894
        %v1071 = vunpack.c.h.s8.bf16 %v895
        %v1072 = vunpack.c.h.s8.bf16 %v896
        %v1073 = vunpack.c.l.s8.bf16 %v897
        %v1074 = vunpack.c.l.s8.bf16 %v898
        %v1075 = vunpack.c.l.s8.bf16 %v899
        %v1076 = vunpack.c.l.s8.bf16 %v900
        %v1077 = vunpack.c.h.s8.bf16 %v897
        %v1078 = vunpack.c.h.s8.bf16 %v898
        %v1079 = vunpack.c.h.s8.bf16 %v899
        %v1080 = vunpack.c.h.s8.bf16 %v900
        %v1081 = vunpack.c.l.s8.bf16 %v901
        %v1082 = vunpack.c.l.s8.bf16 %v902
        %v1083 = vunpack.c.l.s8.bf16 %v903
        %v1084 = vunpack.c.l.s8.bf16 %v904
        %v1085 = vunpack.c.h.s8.bf16 %v901
        %v1086 = vunpack.c.h.s8.bf16 %v902
        %v1087 = vunpack.c.h.s8.bf16 %v903
        %v1088 = vunpack.c.h.s8.bf16 %v904
        %v1089 = vunpack.c.l.s8.bf16 %v905
        %v1090 = vunpack.c.l.s8.bf16 %v906
        %v1091 = vunpack.c.l.s8.bf16 %v907
        %v1092 = vunpack.c.l.s8.bf16 %v908
        %v1093 = vunpack.c.h.s8.bf16 %v905
        %v1094 = vunpack.c.h.s8.bf16 %v906
        %v1095 = vunpack.c.h.s8.bf16 %v907
        %v1096 = vunpack.c.h.s8.bf16 %v908
        %v1097 = vunpack.c.l.s8.bf16 %v909
        %v1098 = vunpack.c.l.s8.bf16 %v910
        %v1099 = vunpack.c.l.s8.bf16 %v911
        %v1100 = vunpack.c.l.s8.bf16 %v912
        %v1101 = vunpack.c.h.s8.bf16 %v909
        %v1102 = vunpack.c.h.s8.bf16 %v910
        %v1103 = vunpack.c.h.s8.bf16 %v911
        %v1104 = vunpack.c.h.s8.bf16 %v912
        %v1105 = vunpack.c.l.s8.bf16 %v913
        %v1106 = vunpack.c.l.s8.bf16 %v914
        %v1107 = vunpack.c.l.s8.bf16 %v915
        %v1108 = vunpack.c.l.s8.bf16 %v916
        %v1109 = vunpack.c.h.s8.bf16 %v913
        %v1110 = vunpack.c.h.s8.bf16 %v914
        %v1111 = vunpack.c.h.s8.bf16 %v915
        %v1112 = vunpack.c.h.s8.bf16 %v916
        %v1113 = vunpack.c.l.s8.bf16 %v917
        %v1114 = vunpack.c.l.s8.bf16 %v918
        %v1115 = vunpack.c.l.s8.bf16 %v919
        %v1116 = vunpack.c.l.s8.bf16 %v920
        %v1117 = vunpack.c.h.s8.bf16 %v917
        %v1118 = vunpack.c.h.s8.bf16 %v918
        %v1119 = vunpack.c.h.s8.bf16 %v919
        %v1120 = vunpack.c.h.s8.bf16 %v920
        %v1121 = vunpack.c.l.s8.bf16 %v921
        %v1122 = vunpack.c.l.s8.bf16 %v922
        %v1123 = vunpack.c.l.s8.bf16 %v923
        %v1124 = vunpack.c.l.s8.bf16 %v924
        %v1125 = vunpack.c.h.s8.bf16 %v921
        %v1126 = vunpack.c.h.s8.bf16 %v922
        %v1127 = vunpack.c.h.s8.bf16 %v923
        %v1128 = vunpack.c.h.s8.bf16 %v924
        %v1129 = vunpack.c.l.s8.bf16 %v925
        %v1130 = vunpack.c.l.s8.bf16 %v926
        %v1131 = vunpack.c.l.s8.bf16 %v927
        %v1132 = vunpack.c.l.s8.bf16 %v928
        %v1133 = vunpack.c.h.s8.bf16 %v925
        %v1134 = vunpack.c.h.s8.bf16 %v926
        %v1135 = vunpack.c.h.s8.bf16 %v927
        %v1136 = vunpack.c.h.s8.bf16 %v928
        %v1137 = vunpack.c.l.s8.bf16 %v929
        %v1138 = vunpack.c.l.s8.bf16 %v930
        %v1139 = vunpack.c.l.s8.bf16 %v931
        %v1140 = vunpack.c.l.s8.bf16 %v932
        %v1141 = vunpack.c.h.s8.bf16 %v929
        %v1142 = vunpack.c.h.s8.bf16 %v930
        %v1143 = vunpack.c.h.s8.bf16 %v931
        %v1144 = vunpack.c.h.s8.bf16 %v932
        %v1145 = vunpack.c.l.s8.bf16 %v933
        %v1146 = vunpack.c.l.s8.bf16 %v934
        %v1147 = vunpack.c.l.s8.bf16 %v935
        %v1148 = vunpack.c.l.s8.bf16 %v936
        %v1149 = vunpack.c.h.s8.bf16 %v933
        %v1150 = vunpack.c.h.s8.bf16 %v934
        %v1151 = vunpack.c.h.s8.bf16 %v935
        %v1152 = vunpack.c.h.s8.bf16 %v936
        %v1153 = vunpack.c.l.s8.bf16 %v937
        %v1154 = vunpack.c.l.s8.bf16 %v938
        %v1155 = vunpack.c.l.s8.bf16 %v939
        %v1156 = vunpack.c.l.s8.bf16 %v940
        %v1157 = vunpack.c.h.s8.bf16 %v937
        %v1158 = vunpack.c.h.s8.bf16 %v938
        %v1159 = vunpack.c.h.s8.bf16 %v939
        %v1160 = vunpack.c.h.s8.bf16 %v940
        %v1161 = vunpack.c.l.s8.bf16 %v941
        %v1162 = vunpack.c.l.s8.bf16 %v942
        %v1163 = vunpack.c.l.s8.bf16 %v943
        %v1164 = vunpack.c.l.s8.bf16 %v944
        %v1165 = vunpack.c.h.s8.bf16 %v941
        %v1166 = vunpack.c.h.s8.bf16 %v942
        %v1167 = vunpack.c.h.s8.bf16 %v943
        %v1168 = vunpack.c.h.s8.bf16 %v944
        %v1169 = vunpack.c.l.s8.bf16 %v945
        %v1170 = vunpack.c.l.s8.bf16 %v946
        %v1171 = vunpack.c.l.s8.bf16 %v947
        %v1172 = vunpack.c.l.s8.bf16 %v948
        %v1173 = vunpack.c.h.s8.bf16 %v945
        %v1174 = vunpack.c.h.s8.bf16 %v946
        %v1175 = vunpack.c.h.s8.bf16 %v947
        %v1176 = vunpack.c.h.s8.bf16 %v948
        %v1177 = vunpack.c.l.s8.bf16 %v949
        %v1178 = vunpack.c.l.s8.bf16 %v950
        %v1179 = vunpack.c.l.s8.bf16 %v951
        %v1180 = vunpack.c.l.s8.bf16 %v952
        %v1181 = vunpack.c.h.s8.bf16 %v949
        %v1182 = vunpack.c.h.s8.bf16 %v950
        %v1183 = vunpack.c.h.s8.bf16 %v951
        %v1184 = vunpack.c.h.s8.bf16 %v952
        %v1185 = vunpack.c.l.s8.bf16 %v953
        %v1186 = vunpack.c.l.s8.bf16 %v954
        %v1187 = vunpack.c.l.s8.bf16 %v955
        %v1188 = vunpack.c.l.s8.bf16 %v956
        %v1189 = vunpack.c.h.s8.bf16 %v953
        %v1190 = vunpack.c.h.s8.bf16 %v954
        %v1191 = vunpack.c.h.s8.bf16 %v955
        %v1192 = vunpack.c.h.s8.bf16 %v956
        %v1193 = vunpack.c.l.s8.bf16 %v957
        %v1194 = vunpack.c.l.s8.bf16 %v958
        %v1195 = vunpack.c.l.s8.bf16 %v959
        %v1196 = vunpack.c.l.s8.bf16 %v960
        %v1197 = vunpack.c.h.s8.bf16 %v957
        %v1198 = vunpack.c.h.s8.bf16 %v958
        %v1199 = vunpack.c.h.s8.bf16 %v959
        %v1200 = vunpack.c.h.s8.bf16 %v960
        %v1201 = vunpack.c.l.s8.bf16 %v961
        %v1202 = vunpack.c.l.s8.bf16 %v962
        %v1203 = vunpack.c.l.s8.bf16 %v963
        %v1204 = vunpack.c.l.s8.bf16 %v964
        %v1205 = vunpack.c.h.s8.bf16 %v961
        %v1206 = vunpack.c.h.s8.bf16 %v962
        %v1207 = vunpack.c.h.s8.bf16 %v963
        %v1208 = vunpack.c.h.s8.bf16 %v964
        %v1209 = vunpack.c.l.s8.bf16 %v965
        %v1210 = vunpack.c.l.s8.bf16 %v966
        %v1211 = vunpack.c.l.s8.bf16 %v967
        %v1212 = vunpack.c.l.s8.bf16 %v968
        %v1213 = vunpack.c.h.s8.bf16 %v965
        %v1214 = vunpack.c.h.s8.bf16 %v966
        %v1215 = vunpack.c.h.s8.bf16 %v967
        %v1216 = vunpack.c.h.s8.bf16 %v968
        %v1217 = vunpack.c.l.s8.bf16 %v969
        %v1218 = vunpack.c.l.s8.bf16 %v970
        %v1219 = vunpack.c.l.s8.bf16 %v971
        %v1220 = vunpack.c.l.s8.bf16 %v972
        %v1221 = vunpack.c.h.s8.bf16 %v969
        %v1222 = vunpack.c.h.s8.bf16 %v970
        %v1223 = vunpack.c.h.s8.bf16 %v971
        %v1224 = vunpack.c.h.s8.bf16 %v972
        %v1225 = vunpack.c.l.s8.bf16 %v973
        %v1226 = vunpack.c.l.s8.bf16 %v974
        %v1227 = vunpack.c.l.s8.bf16 %v975
        %v1228 = vunpack.c.l.s8.bf16 %v976
        %v1229 = vunpack.c.h.s8.bf16 %v973
        %v1230 = vunpack.c.h.s8.bf16 %v974
        %v1231 = vunpack.c.h.s8.bf16 %v975
        %v1232 = vunpack.c.h.s8.bf16 %v976
        %v1237 = vunpack.c.l.b16 %v845
        %v1238 = vunpack.c.h.b16 %v845
        %v1239 = vunpack.c.l.b16 %v846
        %v1240 = vunpack.c.h.b16 %v846
        %v1241 = vunpack.c.l.b16 %v847
        %v1242 = vunpack.c.h.b16 %v847
        %v1243 = vunpack.c.l.b16 %v848
        %v1244 = vunpack.c.h.b16 %v848
        %v1245 = vpack.c.b16 %v1237, %v1237
        %v1246 = vpack.c.b16 %v1238, %v1238
        %v1247 = vpack.c.b16 %v1239, %v1239
        %v1248 = vpack.c.b16 %v1240, %v1240
        %v1249 = vpack.c.b16 %v1241, %v1241
        %v1250 = vpack.c.b16 %v1242, %v1242
        %v1251 = vpack.c.b16 %v1243, %v1243
        %v1252 = vpack.c.b16 %v1244, %v1244
        %1261 = vmatprep.subr.bf16.mxu0 %v978
        %1262 = vmatpush1.bf16.msra.mxu0 %v977
        %1263 = vmatprep.subr.bf16.mxu0 %v982
        %1264 = vmatpush1.bf16.msra.mxu0 %v981
        %1265 = vmatprep.subr.bf16.mxu0 %v986
        %1266 = vmatpush1.bf16.msra.mxu0 %v985
        %1267 = vmatprep.subr.bf16.mxu0 %v990
        %1268 = vmatpush1.bf16.msra.mxu0 %v989
        %1269 = vmatprep.subr.bf16.mxu0 %v994
        %1270 = vmatpush1.bf16.msra.mxu0 %v993
        %1271 = vmatprep.subr.bf16.mxu0 %v998
        %1272 = vmatpush1.bf16.msra.mxu0 %v997
        %1273 = vmatprep.subr.bf16.mxu0 %v1002
        %1274 = vmatpush1.bf16.msra.mxu0 %v1001
        %1275 = vmatprep.subr.bf16.mxu0 %v1006
        %1276 = vmatpush1.bf16.msra.mxu0 %v1005
        %1277 = vmatprep.subr.bf16.mxu0 %v1010
        %1278 = vmatpush1.bf16.msra.mxu0 %v1009
        %1279 = vmatprep.subr.bf16.mxu0 %v1014
        %1280 = vmatpush1.bf16.msra.mxu0 %v1013
        %1281 = vmatprep.subr.bf16.mxu0 %v1018
        %1282 = vmatpush1.bf16.msra.mxu0 %v1017
        %1283 = vmatprep.subr.bf16.mxu0 %v1022
        %1284 = vmatpush1.bf16.msra.mxu0 %v1021
        %1285 = vmatprep.subr.bf16.mxu0 %v1026
        %1286 = vmatpush1.bf16.msra.mxu0 %v1025
        %1287 = vmatprep.subr.bf16.mxu0 %v1030
        %1288 = vmatpush1.bf16.msra.mxu0 %v1029
        %1289 = vmatprep.subr.bf16.mxu0 %v1034
        %1290 = vmatpush1.bf16.msra.mxu0 %v1033
        %1291 = vmatprep.subr.bf16.mxu0 %v1038
        %1292 = vmatpush1.bf16.msra.mxu0 %v1037
        %1293 = vmatprep.mubr.bf16.mxu0 %v1246
        %1294 = vmatmul.mubr.bf16.gmra.mrb[0].mxu0 %v1245
        %v1295 = vpop.f32.mrb[0].mxu0
        %v1296 = vadd.f32 0.0, %v1295
        %v1297 = vpop.f32.mrb[0].mxu0
        %v1298 = vadd.f32 0.0, %v1297
        %v1299 = vpop.f32.mrb[0].mxu0
        %v1300 = vpop.f32.mrb[0].mxu0
        %1301 = vdwg.mxu0
        %1302 = vmatprep.subr.bf16.mxu0 %v1042
        %1303 = vmatpush1.bf16.msra.mxu0 %v1041
        %1304 = vmatprep.subr.bf16.mxu0 %v1046
        %1305 = vmatpush1.bf16.msra.mxu0 %v1045
        %1306 = vmatprep.subr.bf16.mxu0 %v1050
        %1307 = vmatpush1.bf16.msra.mxu0 %v1049
        %1308 = vmatprep.subr.bf16.mxu0 %v1054
        %1309 = vmatpush1.bf16.msra.mxu0 %v1053
        %1310 = vmatprep.subr.bf16.mxu0 %v1058
        %1311 = vmatpush1.bf16.msra.mxu0 %v1057
        %1312 = vmatprep.subr.bf16.mxu0 %v1062
        %1313 = vmatpush1.bf16.msra.mxu0 %v1061
        %1314 = vmatprep.subr.bf16.mxu0 %v1066
        %1315 = vmatpush1.bf16.msra.mxu0 %v1065
        %1316 = vmatprep.subr.bf16.mxu0 %v1070
        %1317 = vmatpush1.bf16.msra.mxu0 %v1069
        %1318 = vmatprep.subr.bf16.mxu0 %v1074
        %1319 = vmatpush1.bf16.msra.mxu0 %v1073
        %1320 = vmatprep.subr.bf16.mxu0 %v1078
        %1321 = vmatpush1.bf16.msra.mxu0 %v1077
        %1322 = vmatprep.subr.bf16.mxu0 %v1082
        %1323 = vmatpush1.bf16.msra.mxu0 %v1081
        %1324 = vmatprep.subr.bf16.mxu0 %v1086
        %1325 = vmatpush1.bf16.msra.mxu0 %v1085
        %1326 = vmatprep.subr.bf16.mxu0 %v1090
        %1327 = vmatpush1.bf16.msra.mxu0 %v1089
        %1328 = vmatprep.subr.bf16.mxu0 %v1094
        %1329 = vmatpush1.bf16.msra.mxu0 %v1093
        %1330 = vmatprep.subr.bf16.mxu0 %v1098
        %1331 = vmatpush1.bf16.msra.mxu0 %v1097
        %1332 = vmatprep.subr.bf16.mxu0 %v1102
        %1333 = vmatpush1.bf16.msra.mxu0 %v1101
        %1334 = vmatprep.mubr.bf16.mxu0 %v1248
        %1335 = vmatmul.mubr.bf16.gmra.mrb[0].mxu0 %v1247
        %v1336 = vpop.f32.mrb[0].mxu0
        %v1337 = vadd.f32 %v1296, %v1336
        %v1338 = vpop.f32.mrb[0].mxu0
        %v1339 = vadd.f32 %v1298, %v1338
        %v1340 = vpop.f32.mrb[0].mxu0
        %v1341 = vpop.f32.mrb[0].mxu0
        %1342 = vdwg.mxu0
        %1343 = vmatprep.subr.bf16.mxu0 %v1106
        %1344 = vmatpush1.bf16.msra.mxu0 %v1105
        %1345 = vmatprep.subr.bf16.mxu0 %v1110
        %1346 = vmatpush1.bf16.msra.mxu0 %v1109
        %1347 = vmatprep.subr.bf16.mxu0 %v1114
        %1348 = vmatpush1.bf16.msra.mxu0 %v1113
        %1349 = vmatprep.subr.bf16.mxu0 %v1118
        %1350 = vmatpush1.bf16.msra.mxu0 %v1117
        %1351 = vmatprep.subr.bf16.mxu0 %v1122
        %1352 = vmatpush1.bf16.msra.mxu0 %v1121
        %1353 = vmatprep.subr.bf16.mxu0 %v1126
        %1354 = vmatpush1.bf16.msra.mxu0 %v1125
        %1355 = vmatprep.subr.bf16.mxu0 %v1130
        %1356 = vmatpush1.bf16.msra.mxu0 %v1129
        %1357 = vmatprep.subr.bf16.mxu0 %v1134
        %1358 = vmatpush1.bf16.msra.mxu0 %v1133
        %1359 = vmatprep.subr.bf16.mxu0 %v1138
        %1360 = vmatpush1.bf16.msra.mxu0 %v1137
        %1361 = vmatprep.subr.bf16.mxu0 %v1142
        %1362 = vmatpush1.bf16.msra.mxu0 %v1141
        %1363 = vmatprep.subr.bf16.mxu0 %v1146
        %1364 = vmatpush1.bf16.msra.mxu0 %v1145
        %1365 = vmatprep.subr.bf16.mxu0 %v1150
        %1366 = vmatpush1.bf16.msra.mxu0 %v1149
        %1367 = vmatprep.subr.bf16.mxu0 %v1154
        %1368 = vmatpush1.bf16.msra.mxu0 %v1153
        %1369 = vmatprep.subr.bf16.mxu0 %v1158
        %1370 = vmatpush1.bf16.msra.mxu0 %v1157
        %1371 = vmatprep.subr.bf16.mxu0 %v1162
        %1372 = vmatpush1.bf16.msra.mxu0 %v1161
        %1373 = vmatprep.subr.bf16.mxu0 %v1166
        %1374 = vmatpush1.bf16.msra.mxu0 %v1165
        %1375 = vmatprep.mubr.bf16.mxu0 %v1250
        %1376 = vmatmul.mubr.bf16.gmra.mrb[0].mxu0 %v1249
        %v1377 = vpop.f32.mrb[0].mxu0
        %v1378 = vadd.f32 %v1337, %v1377
        %v1379 = vpop.f32.mrb[0].mxu0
        %v1380 = vadd.f32 %v1339, %v1379
        %v1381 = vpop.f32.mrb[0].mxu0
        %v1382 = vpop.f32.mrb[0].mxu0
        %1383 = vdwg.mxu0
        %1384 = vmatprep.subr.bf16.mxu0 %v1170
        %1385 = vmatpush1.bf16.msra.mxu0 %v1169
        %1386 = vmatprep.subr.bf16.mxu0 %v1174
        %1387 = vmatpush1.bf16.msra.mxu0 %v1173
        %1388 = vmatprep.subr.bf16.mxu0 %v1178
        %1389 = vmatpush1.bf16.msra.mxu0 %v1177
        %1390 = vmatprep.subr.bf16.mxu0 %v1182
        %1391 = vmatpush1.bf16.msra.mxu0 %v1181
        %1392 = vmatprep.subr.bf16.mxu0 %v1186
        %1393 = vmatpush1.bf16.msra.mxu0 %v1185
        %1394 = vmatprep.subr.bf16.mxu0 %v1190
        %1395 = vmatpush1.bf16.msra.mxu0 %v1189
        %1396 = vmatprep.subr.bf16.mxu0 %v1194
        %1397 = vmatpush1.bf16.msra.mxu0 %v1193
        %1398 = vmatprep.subr.bf16.mxu0 %v1198
        %1399 = vmatpush1.bf16.msra.mxu0 %v1197
        %1400 = vmatprep.subr.bf16.mxu0 %v1202
        %1401 = vmatpush1.bf16.msra.mxu0 %v1201
        %1402 = vmatprep.subr.bf16.mxu0 %v1206
        %1403 = vmatpush1.bf16.msra.mxu0 %v1205
        %1404 = vmatprep.subr.bf16.mxu0 %v1210
        %1405 = vmatpush1.bf16.msra.mxu0 %v1209
        %1406 = vmatprep.subr.bf16.mxu0 %v1214
        %1407 = vmatpush1.bf16.msra.mxu0 %v1213
        %1408 = vmatprep.subr.bf16.mxu0 %v1218
        %1409 = vmatpush1.bf16.msra.mxu0 %v1217
        %1410 = vmatprep.subr.bf16.mxu0 %v1222
        %1411 = vmatpush1.bf16.msra.mxu0 %v1221
        %1412 = vmatprep.subr.bf16.mxu0 %v1226
        %1413 = vmatpush1.bf16.msra.mxu0 %v1225
        %1414 = vmatprep.subr.bf16.mxu0 %v1230
        %1415 = vmatpush1.bf16.msra.mxu0 %v1229
        %1416 = vmatprep.mubr.bf16.mxu0 %v1252
        %1417 = vmatmul.mubr.bf16.gmra.mrb[0].mxu0 %v1251
        %v1418 = vpop.f32.mrb[0].mxu0
        %v1419 = vadd.f32 %v1378, %v1418
        %v1420 = vpop.f32.mrb[0].mxu0
        %v1421 = vadd.f32 %v1380, %v1420
        %v1422 = vpop.f32.mrb[0].mxu0
        %v1423 = vpop.f32.mrb[0].mxu0
        %1424 = vdwg.mxu0
        %1425 = vmatprep.subr.bf16.mxu0 %v980
        %1426 = vmatpush1.bf16.msra.mxu0 %v979
        %1427 = vmatprep.subr.bf16.mxu0 %v984
        %1428 = vmatpush1.bf16.msra.mxu0 %v983
        %1429 = vmatprep.subr.bf16.mxu0 %v988
        %1430 = vmatpush1.bf16.msra.mxu0 %v987
        %1431 = vmatprep.subr.bf16.mxu0 %v992
        %1432 = vmatpush1.bf16.msra.mxu0 %v991
        %1433 = vmatprep.subr.bf16.mxu0 %v996
        %1434 = vmatpush1.bf16.msra.mxu0 %v995
        %1435 = vmatprep.subr.bf16.mxu0 %v1000
        %1436 = vmatpush1.bf16.msra.mxu0 %v999
        %1437 = vmatprep.subr.bf16.mxu0 %v1004
        %1438 = vmatpush1.bf16.msra.mxu0 %v1003
        %1439 = vmatprep.subr.bf16.mxu0 %v1008
        %1440 = vmatpush1.bf16.msra.mxu0 %v1007
        %1441 = vmatprep.subr.bf16.mxu0 %v1012
        %1442 = vmatpush1.bf16.msra.mxu0 %v1011
        %1443 = vmatprep.subr.bf16.mxu0 %v1016
        %1444 = vmatpush1.bf16.msra.mxu0 %v1015
        %1445 = vmatprep.subr.bf16.mxu0 %v1020
        %1446 = vmatpush1.bf16.msra.mxu0 %v1019
        %1447 = vmatprep.subr.bf16.mxu0 %v1024
        %1448 = vmatpush1.bf16.msra.mxu0 %v1023
        %1449 = vmatprep.subr.bf16.mxu0 %v1028
        %1450 = vmatpush1.bf16.msra.mxu0 %v1027
        %1451 = vmatprep.subr.bf16.mxu0 %v1032
        %1452 = vmatpush1.bf16.msra.mxu0 %v1031
        %1453 = vmatprep.subr.bf16.mxu0 %v1036
        %1454 = vmatpush1.bf16.msra.mxu0 %v1035
        %1455 = vmatprep.subr.bf16.mxu0 %v1040
        %1456 = vmatpush1.bf16.msra.mxu0 %v1039
        %1457 = vmatprep.mubr.bf16.mxu0 %v1246
        %1458 = vmatmul.mubr.bf16.gmra.mrb[0].mxu0 %v1245
        %v1459 = vpop.f32.mrb[0].mxu0
        %v1460 = vadd.f32 0.0, %v1459
        %v1461 = vpop.f32.mrb[0].mxu0
        %v1462 = vadd.f32 0.0, %v1461
        %v1463 = vpop.f32.mrb[0].mxu0
        %v1464 = vpop.f32.mrb[0].mxu0
        %1465 = vdwg.mxu0
        %1466 = vmatprep.subr.bf16.mxu0 %v1044
        %1467 = vmatpush1.bf16.msra.mxu0 %v1043
        %1468 = vmatprep.subr.bf16.mxu0 %v1048
        %1469 = vmatpush1.bf16.msra.mxu0 %v1047
        %1470 = vmatprep.subr.bf16.mxu0 %v1052
        %1471 = vmatpush1.bf16.msra.mxu0 %v1051
        %1472 = vmatprep.subr.bf16.mxu0 %v1056
        %1473 = vmatpush1.bf16.msra.mxu0 %v1055
        %1474 = vmatprep.subr.bf16.mxu0 %v1060
        %1475 = vmatpush1.bf16.msra.mxu0 %v1059
        %1476 = vmatprep.subr.bf16.mxu0 %v1064
        %1477 = vmatpush1.bf16.msra.mxu0 %v1063
        %1478 = vmatprep.subr.bf16.mxu0 %v1068
        %1479 = vmatpush1.bf16.msra.mxu0 %v1067
        %1480 = vmatprep.subr.bf16.mxu0 %v1072
        %1481 = vmatpush1.bf16.msra.mxu0 %v1071
        %1482 = vmatprep.subr.bf16.mxu0 %v1076
        %1483 = vmatpush1.bf16.msra.mxu0 %v1075
        %1484 = vmatprep.subr.bf16.mxu0 %v1080
        %1485 = vmatpush1.bf16.msra.mxu0 %v1079
        %1486 = vmatprep.subr.bf16.mxu0 %v1084
        %1487 = vmatpush1.bf16.msra.mxu0 %v1083
        %1488 = vmatprep.subr.bf16.mxu0 %v1088
        %1489 = vmatpush1.bf16.msra.mxu0 %v1087
        %1490 = vmatprep.subr.bf16.mxu0 %v1092
        %1491 = vmatpush1.bf16.msra.mxu0 %v1091
        %1492 = vmatprep.subr.bf16.mxu0 %v1096
        %1493 = vmatpush1.bf16.msra.mxu0 %v1095
        %1494 = vmatprep.subr.bf16.mxu0 %v1100
        %1495 = vmatpush1.bf16.msra.mxu0 %v1099
        %1496 = vmatprep.subr.bf16.mxu0 %v1104
        %1497 = vmatpush1.bf16.msra.mxu0 %v1103
        %1498 = vmatprep.mubr.bf16.mxu0 %v1248
        %1499 = vmatmul.mubr.bf16.gmra.mrb[0].mxu0 %v1247
        %v1500 = vpop.f32.mrb[0].mxu0
        %v1501 = vadd.f32 %v1460, %v1500
        %v1502 = vpop.f32.mrb[0].mxu0
        %v1503 = vadd.f32 %v1462, %v1502
        %v1504 = vpop.f32.mrb[0].mxu0
        %v1505 = vpop.f32.mrb[0].mxu0
        %1506 = vdwg.mxu0
        %1507 = vmatprep.subr.bf16.mxu0 %v1108
        %1508 = vmatpush1.bf16.msra.mxu0 %v1107
        %1509 = vmatprep.subr.bf16.mxu0 %v1112
        %1510 = vmatpush1.bf16.msra.mxu0 %v1111
        %1511 = vmatprep.subr.bf16.mxu0 %v1116
        %1512 = vmatpush1.bf16.msra.mxu0 %v1115
        %1513 = vmatprep.subr.bf16.mxu0 %v1120
        %1514 = vmatpush1.bf16.msra.mxu0 %v1119
        %1515 = vmatprep.subr.bf16.mxu0 %v1124
        %1516 = vmatpush1.bf16.msra.mxu0 %v1123
        %1517 = vmatprep.subr.bf16.mxu0 %v1128
        %1518 = vmatpush1.bf16.msra.mxu0 %v1127
        %1519 = vmatprep.subr.bf16.mxu0 %v1132
        %1520 = vmatpush1.bf16.msra.mxu0 %v1131
        %1521 = vmatprep.subr.bf16.mxu0 %v1136
        %1522 = vmatpush1.bf16.msra.mxu0 %v1135
        %1523 = vmatprep.subr.bf16.mxu0 %v1140
        %1524 = vmatpush1.bf16.msra.mxu0 %v1139
        %1525 = vmatprep.subr.bf16.mxu0 %v1144
        %1526 = vmatpush1.bf16.msra.mxu0 %v1143
        %1527 = vmatprep.subr.bf16.mxu0 %v1148
        %1528 = vmatpush1.bf16.msra.mxu0 %v1147
        %1529 = vmatprep.subr.bf16.mxu0 %v1152
        %1530 = vmatpush1.bf16.msra.mxu0 %v1151
        %1531 = vmatprep.subr.bf16.mxu0 %v1156
        %1532 = vmatpush1.bf16.msra.mxu0 %v1155
        %1533 = vmatprep.subr.bf16.mxu0 %v1160
        %1534 = vmatpush1.bf16.msra.mxu0 %v1159
        %1535 = vmatprep.subr.bf16.mxu0 %v1164
        %1536 = vmatpush1.bf16.msra.mxu0 %v1163
        %1537 = vmatprep.subr.bf16.mxu0 %v1168
        %1538 = vmatpush1.bf16.msra.mxu0 %v1167
        %1539 = vmatprep.mubr.bf16.mxu0 %v1250
        %1540 = vmatmul.mubr.bf16.gmra.mrb[0].mxu0 %v1249
        %v1541 = vpop.f32.mrb[0].mxu0
        %v1542 = vadd.f32 %v1501, %v1541
        %v1543 = vpop.f32.mrb[0].mxu0
        %v1544 = vadd.f32 %v1503, %v1543
        %v1545 = vpop.f32.mrb[0].mxu0
        %v1546 = vpop.f32.mrb[0].mxu0
        %1547 = vdwg.mxu0
        %1548 = vmatprep.subr.bf16.mxu0 %v1172
        %1549 = vmatpush1.bf16.msra.mxu0 %v1171
        %1550 = vmatprep.subr.bf16.mxu0 %v1176
        %1551 = vmatpush1.bf16.msra.mxu0 %v1175
        %1552 = vmatprep.subr.bf16.mxu0 %v1180
        %1553 = vmatpush1.bf16.msra.mxu0 %v1179
        %1554 = vmatprep.subr.bf16.mxu0 %v1184
        %1555 = vmatpush1.bf16.msra.mxu0 %v1183
        %1556 = vmatprep.subr.bf16.mxu0 %v1188
        %1557 = vmatpush1.bf16.msra.mxu0 %v1187
        %1558 = vmatprep.subr.bf16.mxu0 %v1192
        %1559 = vmatpush1.bf16.msra.mxu0 %v1191
        %1560 = vmatprep.subr.bf16.mxu0 %v1196
        %1561 = vmatpush1.bf16.msra.mxu0 %v1195
        %1562 = vmatprep.subr.bf16.mxu0 %v1200
        %1563 = vmatpush1.bf16.msra.mxu0 %v1199
        %1564 = vmatprep.subr.bf16.mxu0 %v1204
        %1565 = vmatpush1.bf16.msra.mxu0 %v1203
        %1566 = vmatprep.subr.bf16.mxu0 %v1208
        %1567 = vmatpush1.bf16.msra.mxu0 %v1207
        %1568 = vmatprep.subr.bf16.mxu0 %v1212
        %1569 = vmatpush1.bf16.msra.mxu0 %v1211
        %1570 = vmatprep.subr.bf16.mxu0 %v1216
        %1571 = vmatpush1.bf16.msra.mxu0 %v1215
        %1572 = vmatprep.subr.bf16.mxu0 %v1220
        %1573 = vmatpush1.bf16.msra.mxu0 %v1219
        %1574 = vmatprep.subr.bf16.mxu0 %v1224
        %1575 = vmatpush1.bf16.msra.mxu0 %v1223
        %1576 = vmatprep.subr.bf16.mxu0 %v1228
        %1577 = vmatpush1.bf16.msra.mxu0 %v1227
        %1578 = vmatprep.subr.bf16.mxu0 %v1232
        %1579 = vmatpush1.bf16.msra.mxu0 %v1231
        %1580 = vmatprep.mubr.bf16.mxu0 %v1252
        %1581 = vmatmul.mubr.bf16.gmra.mrb[0].mxu0 %v1251
        %v1582 = vpop.f32.mrb[0].mxu0
        %v1583 = vadd.f32 %v1542, %v1582
        %v1584 = vpop.f32.mrb[0].mxu0
        %v1585 = vadd.f32 %v1544, %v1584
        %v1586 = vpop.f32.mrb[0].mxu0
        %v1587 = vpop.f32.mrb[0].mxu0
        %1588 = vdwg.mxu0
        %v1589 = vld [vmem:[%s459] sm:$0xf]
        %v1591 = vlaneseq
        %v1592 = vshrl.u32 %v1591, 7
        %v1593 = vsub.s32 0, %v1592
        %v1594 = vrot.slane %v1589, %v1593
        %v1595 = vlaneseq
        %v1596 = vshrl.u32 %v1595, 7
        %v1597 = vsub.s32 1, %v1596
        %v1598 = vrot.slane %v1589, %v1597
        %v1599 = vlaneseq
        %v1600 = vshrl.u32 %v1599, 7
        %v1601 = vsub.s32 2, %v1600
        %v1602 = vrot.slane %v1589, %v1601
        %v1603 = vlaneseq
        %v1604 = vshrl.u32 %v1603, 7
        %v1605 = vsub.s32 3, %v1604
        %v1606 = vrot.slane %v1589, %v1605
        %v1611 = vmul.f32 %v1419, %v1594
        %v1612 = vmul.f32 %v1421, %v1598
        %v1613 = vmul.f32 %v1583, %v1602
        %v1614 = vmul.f32 %v1585, %v1606
        %v1615 = vld [vmem:[%s466] sm:$0xf]
        %v1617 = vlaneseq
        %v1618 = vshrl.u32 %v1617, 7
        %v1619 = vsub.s32 0, %v1618
        %v1620 = vrot.slane %v1615, %v1619
        %v1621 = vlaneseq
        %v1622 = vshrl.u32 %v1621, 7
        %v1623 = vsub.s32 1, %v1622
        %v1624 = vrot.slane %v1615, %v1623
        %v1625 = vlaneseq
        %v1626 = vshrl.u32 %v1625, 7
        %v1627 = vsub.s32 2, %v1626
        %v1628 = vrot.slane %v1615, %v1627
        %v1629 = vlaneseq
        %v1630 = vshrl.u32 %v1629, 7
        %v1631 = vsub.s32 3, %v1630
        %v1632 = vrot.slane %v1615, %v1631
        %v1637 = vadd.f32 %v1611, %v1620
        %v1638 = vadd.f32 %v1612, %v1624
        %v1639 = vadd.f32 %v1613, %v1628
        %v1640 = vadd.f32 %v1614, %v1632
        %v1641 = vmax.f32 %v1637, 0.0
        %v1642 = vmax.f32 %v1638, 0.0
        %v1643 = vmax.f32 %v1639, 0.0
        %v1644 = vmax.f32 %v1640, 0.0
        %v1645 = vld [vmem:[%s474] sm:$0xff]
        %v1646 = vpack.c.bf16 %v1641, %v1641
        %v1647 = vpack.c.bf16 %v1642, %v1642
        %v1648 = vpack.c.bf16 %v1643, %v1643
        %v1649 = vpack.c.bf16 %v1644, %v1644
        %v1650 = vld [vmem:[%s406] sm:$0xf]
        %v1651 = vld [vmem:[%s406 + $0x4] sm:$0xf]
        %v1652 = vld [vmem:[%s406 + $0x8] sm:$0xf]
        %v1653 = vld [vmem:[%s406 + $0xc] sm:$0xf]
        %v1654 = vld [vmem:[%s406 + $0x10] sm:$0xf]
        %v1655 = vld [vmem:[%s406 + $0x14] sm:$0xf]
        %v1656 = vld [vmem:[%s406 + $0x18] sm:$0xf]
        %v1657 = vld [vmem:[%s406 + $0x1c] sm:$0xf]
        %v1658 = vld [vmem:[%s406 + $0x20] sm:$0xf]
        %v1659 = vld [vmem:[%s406 + $0x24] sm:$0xf]
        %v1660 = vld [vmem:[%s406 + $0x28] sm:$0xf]
        %v1661 = vld [vmem:[%s406 + $0x2c] sm:$0xf]
        %v1662 = vld [vmem:[%s406 + $0x30] sm:$0xf]
        %v1663 = vld [vmem:[%s406 + $0x34] sm:$0xf]
        %v1664 = vld [vmem:[%s406 + $0x38] sm:$0xf]
        %v1665 = vld [vmem:[%s406 + $0x3c] sm:$0xf]
        %v1666 = vld [vmem:[%s406 + $0x40] sm:$0xf]
        %v1667 = vld [vmem:[%s406 + $0x44] sm:$0xf]
        %v1668 = vld [vmem:[%s406 + $0x48] sm:$0xf]
        %v1669 = vld [vmem:[%s406 + $0x4c] sm:$0xf]
        %v1670 = vld [vmem:[%s406 + $0x50] sm:$0xf]
        %v1671 = vld [vmem:[%s406 + $0x54] sm:$0xf]
        %v1672 = vld [vmem:[%s406 + $0x58] sm:$0xf]
        %v1673 = vld [vmem:[%s406 + $0x5c] sm:$0xf]
        %v1674 = vld [vmem:[%s406 + $0x60] sm:$0xf]
        %v1675 = vld [vmem:[%s406 + $0x64] sm:$0xf]
        %v1676 = vld [vmem:[%s406 + $0x68] sm:$0xf]
        %v1677 = vld [vmem:[%s406 + $0x6c] sm:$0xf]
        %v1678 = vld [vmem:[%s406 + $0x70] sm:$0xf]
        %v1679 = vld [vmem:[%s406 + $0x74] sm:$0xf]
        %v1680 = vld [vmem:[%s406 + $0x78] sm:$0xf]
        %v1681 = vld [vmem:[%s406 + $0x7c] sm:$0xf]
        %v1682 = vld [vmem:[%s406 + $0x80] sm:$0xf]
        %v1683 = vld [vmem:[%s406 + $0x84] sm:$0xf]
        %v1684 = vld [vmem:[%s406 + $0x88] sm:$0xf]
        %v1685 = vld [vmem:[%s406 + $0x8c] sm:$0xf]
        %v1686 = vld [vmem:[%s406 + $0x90] sm:$0xf]
        %v1687 = vld [vmem:[%s406 + $0x94] sm:$0xf]
        %v1688 = vld [vmem:[%s406 + $0x98] sm:$0xf]
        %v1689 = vld [vmem:[%s406 + $0x9c] sm:$0xf]
        %v1690 = vld [vmem:[%s406 + $0xa0] sm:$0xf]
        %v1691 = vld [vmem:[%s406 + $0xa4] sm:$0xf]
        %v1692 = vld [vmem:[%s406 + $0xa8] sm:$0xf]
        %v1693 = vld [vmem:[%s406 + $0xac] sm:$0xf]
        %v1694 = vld [vmem:[%s406 + $0xb0] sm:$0xf]
        %v1695 = vld [vmem:[%s406 + $0xb4] sm:$0xf]
        %v1696 = vld [vmem:[%s406 + $0xb8] sm:$0xf]
        %v1697 = vld [vmem:[%s406 + $0xbc] sm:$0xf]
        %v1698 = vld [vmem:[%s406 + $0xc0] sm:$0xf]
        %v1699 = vld [vmem:[%s406 + $0xc4] sm:$0xf]
        %v1700 = vld [vmem:[%s406 + $0xc8] sm:$0xf]
        %v1701 = vld [vmem:[%s406 + $0xcc] sm:$0xf]
        %v1702 = vld [vmem:[%s406 + $0xd0] sm:$0xf]
        %v1703 = vld [vmem:[%s406 + $0xd4] sm:$0xf]
        %v1704 = vld [vmem:[%s406 + $0xd8] sm:$0xf]
        %v1705 = vld [vmem:[%s406 + $0xdc] sm:$0xf]
        %v1706 = vld [vmem:[%s406 + $0xe0] sm:$0xf]
        %v1707 = vld [vmem:[%s406 + $0xe4] sm:$0xf]
        %v1708 = vld [vmem:[%s406 + $0xe8] sm:$0xf]
        %v1709 = vld [vmem:[%s406 + $0xec] sm:$0xf]
        %v1710 = vld [vmem:[%s406 + $0xf0] sm:$0xf]
        %v1711 = vld [vmem:[%s406 + $0xf4] sm:$0xf]
        %v1712 = vld [vmem:[%s406 + $0xf8] sm:$0xf]
        %v1713 = vld [vmem:[%s406 + $0xfc] sm:$0xf]
        %v1778 = vunpack.c.l.b16 %v1650
        %v1779 = vunpack.c.l.b16 %v1651
        %v1780 = vunpack.c.l.b16 %v1652
        %v1781 = vunpack.c.l.b16 %v1653
        %v1782 = vunpack.c.l.b16 %v1654
        %v1783 = vunpack.c.l.b16 %v1655
        %v1784 = vunpack.c.l.b16 %v1656
        %v1785 = vunpack.c.l.b16 %v1657
        %v1786 = vunpack.c.l.b16 %v1658
        %v1787 = vunpack.c.l.b16 %v1659
        %v1788 = vunpack.c.l.b16 %v1660
        %v1789 = vunpack.c.l.b16 %v1661
        %v1790 = vunpack.c.l.b16 %v1662
        %v1791 = vunpack.c.l.b16 %v1663
        %v1792 = vunpack.c.l.b16 %v1664
        %v1793 = vunpack.c.l.b16 %v1665
        %v1794 = vunpack.c.l.b16 %v1666
        %v1795 = vunpack.c.l.b16 %v1667
        %v1796 = vunpack.c.l.b16 %v1668
        %v1797 = vunpack.c.l.b16 %v1669
        %v1798 = vunpack.c.l.b16 %v1670
        %v1799 = vunpack.c.l.b16 %v1671
        %v1800 = vunpack.c.l.b16 %v1672
        %v1801 = vunpack.c.l.b16 %v1673
        %v1802 = vunpack.c.l.b16 %v1674
        %v1803 = vunpack.c.l.b16 %v1675
        %v1804 = vunpack.c.l.b16 %v1676
        %v1805 = vunpack.c.l.b16 %v1677
        %v1806 = vunpack.c.l.b16 %v1678
        %v1807 = vunpack.c.l.b16 %v1679
        %v1808 = vunpack.c.l.b16 %v1680
        %v1809 = vunpack.c.l.b16 %v1681
        %v1810 = vunpack.c.l.b16 %v1682
        %v1811 = vunpack.c.l.b16 %v1683
        %v1812 = vunpack.c.l.b16 %v1684
        %v1813 = vunpack.c.l.b16 %v1685
        %v1814 = vunpack.c.l.b16 %v1686
        %v1815 = vunpack.c.l.b16 %v1687
        %v1816 = vunpack.c.l.b16 %v1688
        %v1817 = vunpack.c.l.b16 %v1689
        %v1818 = vunpack.c.l.b16 %v1690
        %v1819 = vunpack.c.l.b16 %v1691
        %v1820 = vunpack.c.l.b16 %v1692
        %v1821 = vunpack.c.l.b16 %v1693
        %v1822 = vunpack.c.l.b16 %v1694
        %v1823 = vunpack.c.l.b16 %v1695
        %v1824 = vunpack.c.l.b16 %v1696
        %v1825 = vunpack.c.l.b16 %v1697
        %v1826 = vunpack.c.l.b16 %v1698
        %v1827 = vunpack.c.l.b16 %v1699
        %v1828 = vunpack.c.l.b16 %v1700
        %v1829 = vunpack.c.l.b16 %v1701
        %v1830 = vunpack.c.l.b16 %v1702
        %v1831 = vunpack.c.l.b16 %v1703
        %v1832 = vunpack.c.l.b16 %v1704
        %v1833 = vunpack.c.l.b16 %v1705
        %v1834 = vunpack.c.l.b16 %v1706
        %v1835 = vunpack.c.l.b16 %v1707
        %v1836 = vunpack.c.l.b16 %v1708
        %v1837 = vunpack.c.l.b16 %v1709
        %v1838 = vunpack.c.l.b16 %v1710
        %v1839 = vunpack.c.l.b16 %v1711
        %v1840 = vunpack.c.l.b16 %v1712
        %v1841 = vunpack.c.l.b16 %v1713
        %v1842 = vpack.c.b16 %v1779, %v1778
        %v1843 = vpack.c.b16 %v1781, %v1780
        %v1844 = vpack.c.b16 %v1783, %v1782
        %v1845 = vpack.c.b16 %v1785, %v1784
        %v1846 = vpack.c.b16 %v1787, %v1786
        %v1847 = vpack.c.b16 %v1789, %v1788
        %v1848 = vpack.c.b16 %v1791, %v1790
        %v1849 = vpack.c.b16 %v1793, %v1792
        %v1850 = vpack.c.b16 %v1795, %v1794
        %v1851 = vpack.c.b16 %v1797, %v1796
        %v1852 = vpack.c.b16 %v1799, %v1798
        %v1853 = vpack.c.b16 %v1801, %v1800
        %v1854 = vpack.c.b16 %v1803, %v1802
        %v1855 = vpack.c.b16 %v1805, %v1804
        %v1856 = vpack.c.b16 %v1807, %v1806
        %v1857 = vpack.c.b16 %v1809, %v1808
        %v1858 = vpack.c.b16 %v1811, %v1810
        %v1859 = vpack.c.b16 %v1813, %v1812
        %v1860 = vpack.c.b16 %v1815, %v1814
        %v1861 = vpack.c.b16 %v1817, %v1816
        %v1862 = vpack.c.b16 %v1819, %v1818
        %v1863 = vpack.c.b16 %v1821, %v1820
        %v1864 = vpack.c.b16 %v1823, %v1822
        %v1865 = vpack.c.b16 %v1825, %v1824
        %v1866 = vpack.c.b16 %v1827, %v1826
        %v1867 = vpack.c.b16 %v1829, %v1828
        %v1868 = vpack.c.b16 %v1831, %v1830
        %v1869 = vpack.c.b16 %v1833, %v1832
        %v1870 = vpack.c.b16 %v1835, %v1834
        %v1871 = vpack.c.b16 %v1837, %v1836
        %v1872 = vpack.c.b16 %v1839, %v1838
        %v1873 = vpack.c.b16 %v1841, %v1840
        %1906 = vmatprep.subr.bf16.mxu0 0
        %1907 = vmatpush1.bf16.msra.mxu0 %v1842
        %1908 = vmatprep.subr.bf16.mxu0 0
        %1909 = vmatpush1.bf16.msra.mxu0 %v1843
        %1910 = vmatprep.subr.bf16.mxu0 0
        %1911 = vmatpush1.bf16.msra.mxu0 %v1844
        %1912 = vmatprep.subr.bf16.mxu0 0
        %1913 = vmatpush1.bf16.msra.mxu0 %v1845
        %1914 = vmatprep.subr.bf16.mxu0 0
        %1915 = vmatpush1.bf16.msra.mxu0 %v1846
        %1916 = vmatprep.subr.bf16.mxu0 0
        %1917 = vmatpush1.bf16.msra.mxu0 %v1847
        %1918 = vmatprep.subr.bf16.mxu0 0
        %1919 = vmatpush1.bf16.msra.mxu0 %v1848
        %1920 = vmatprep.subr.bf16.mxu0 0
        %1921 = vmatpush1.bf16.msra.mxu0 %v1849
        %1922 = vmatprep.subr.bf16.mxu0 0
        %1923 = vmatpush1.bf16.msra.mxu0 %v1850
        %1924 = vmatprep.subr.bf16.mxu0 0
        %1925 = vmatpush1.bf16.msra.mxu0 %v1851
        %1926 = vmatprep.subr.bf16.mxu0 0
        %1927 = vmatpush1.bf16.msra.mxu0 %v1852
        %1928 = vmatprep.subr.bf16.mxu0 0
        %1929 = vmatpush1.bf16.msra.mxu0 %v1853
        %1930 = vmatprep.subr.bf16.mxu0 0
        %1931 = vmatpush1.bf16.msra.mxu0 %v1854
        %1932 = vmatprep.subr.bf16.mxu0 0
        %1933 = vmatpush1.bf16.msra.mxu0 %v1855
        %1934 = vmatprep.subr.bf16.mxu0 0
        %1935 = vmatpush1.bf16.msra.mxu0 %v1856
        %1936 = vmatprep.subr.bf16.mxu0 0
        %1937 = vmatpush1.bf16.msra.mxu0 %v1857
        %1938 = vmatprep.mubr.bf16.mxu0 %v1647
        %1939 = vmatmul.mubr.bf16.gmra.mrb[0].mxu0 %v1646
        %v1940 = vpop.f32.mrb[0].mxu0
        %v1941 = vadd.f32 0.0, %v1940
        %v1942 = vpop.f32.mrb[0].mxu0
        %v1943 = vpop.f32.mrb[0].mxu0
        %v1944 = vpop.f32.mrb[0].mxu0
        %1945 = vdwg.mxu0
        %1946 = vmatprep.subr.bf16.mxu0 0
        %1947 = vmatpush1.bf16.msra.mxu0 %v1858
        %1948 = vmatprep.subr.bf16.mxu0 0
        %1949 = vmatpush1.bf16.msra.mxu0 %v1859
        %1950 = vmatprep.subr.bf16.mxu0 0
        %1951 = vmatpush1.bf16.msra.mxu0 %v1860
        %1952 = vmatprep.subr.bf16.mxu0 0
        %1953 = vmatpush1.bf16.msra.mxu0 %v1861
        %1954 = vmatprep.subr.bf16.mxu0 0
        %1955 = vmatpush1.bf16.msra.mxu0 %v1862
        %1956 = vmatprep.subr.bf16.mxu0 0
        %1957 = vmatpush1.bf16.msra.mxu0 %v1863
        %1958 = vmatprep.subr.bf16.mxu0 0
        %1959 = vmatpush1.bf16.msra.mxu0 %v1864
        %1960 = vmatprep.subr.bf16.mxu0 0
        %1961 = vmatpush1.bf16.msra.mxu0 %v1865
        %1962 = vmatprep.subr.bf16.mxu0 0
        %1963 = vmatpush1.bf16.msra.mxu0 %v1866
        %1964 = vmatprep.subr.bf16.mxu0 0
        %1965 = vmatpush1.bf16.msra.mxu0 %v1867
        %1966 = vmatprep.subr.bf16.mxu0 0
        %1967 = vmatpush1.bf16.msra.mxu0 %v1868
        %1968 = vmatprep.subr.bf16.mxu0 0
        %1969 = vmatpush1.bf16.msra.mxu0 %v1869
        %1970 = vmatprep.subr.bf16.mxu0 0
        %1971 = vmatpush1.bf16.msra.mxu0 %v1870
        %1972 = vmatprep.subr.bf16.mxu0 0
        %1973 = vmatpush1.bf16.msra.mxu0 %v1871
        %1974 = vmatprep.subr.bf16.mxu0 0
        %1975 = vmatpush1.bf16.msra.mxu0 %v1872
        %1976 = vmatprep.subr.bf16.mxu0 0
        %1977 = vmatpush1.bf16.msra.mxu0 %v1873
        %1978 = vmatprep.mubr.bf16.mxu0 %v1649
        %1979 = vmatmul.mubr.bf16.gmra.mrb[0].mxu0 %v1648
        %v1980 = vpop.f32.mrb[0].mxu0
        %v1981 = vadd.f32 %v1941, %v1980
        %v1982 = vpop.f32.mrb[0].mxu0
        %v1983 = vpop.f32.mrb[0].mxu0
        %v1984 = vpop.f32.mrb[0].mxu0
        %1985 = vdwg.mxu0
        %v1986 = vadd.f32 %v1645, %v1981
        %1987 = vst [vmem:[%s474] sm:$0xff] %v1986
        %p1988 = scmp.lt.s32.totalorder %s28, 1
        %s1989 = scalar_select %p1988, %s28, 1
        %s1990 = smul.addr %s1989, 8
        %s1991 = scalar_lea.vmem %s8, %s1990
        // Predicated region
        $region77: #{linear_module_forward.1} parent=51 // pred_check
          %p1992 = pneg %p250
        $region78: #{linear_module_forward.1} parent=51 // pred_check_branch
          %1994 = sbr.rel (%p1992) target = $region80
        $region79: #{linear_module_forward.1} parent=51 // pred_region
          _
        $region80: #{linear_module_forward.1} parent=51 // pred_fallthru
          _
      $region52: #{linear_module_forward.1} parent=5 // pred_fallthru
        _
      %p1995 = scmp.le.s32.totalorder 2, %s19
      // Predicated region
      $region81: #{linear_module_forward.1} parent=5 // pred_check
        %p1996 = pneg %p1995
      $region82: #{linear_module_forward.1} parent=5 // pred_check_branch
        %1998 = sbr.rel (%p1996) target = $region84
      $region83: #{linear_module_forward.1} parent=5 // pred_region
        %s1999 = ssub.s32 %s19, 2
        // Predicated region
        $region85: #{linear_module_forward.1} parent=83 // pred_check
          %p2000 = pneg %p256
        $region86: #{linear_module_forward.1} parent=83 // pred_check_branch
          %2002 = sbr.rel (%p2000) target = $region88
        $region87: #{linear_module_forward.1} parent=83 // pred_region
          %p2003 = scmp.lt.s32.totalorder %s30, 1
          %s2004 = scalar_select %p2003, %s30, 1
          %s2005 = smul.addr %s2004, 8
          %s2006 = scalar_lea.vmem %s8, %s2005
        $region88: #{linear_module_forward.1} parent=83 // pred_fallthru
          _
      $region84: #{linear_module_forward.1} parent=5 // pred_fallthru
        _
    $region6: #{linear_module_forward.1} parent=1 // loop_footer
      %s23 = sadd.s32 1, %s19
    $region7: #{linear_module_forward.1} parent=1 // loop_footer_branch
      %18 = sbr.rel target = $region3
    $region8: #{linear_module_forward.1} parent=1 // loop_exit
      _
    %2007 = vsyncpa [#allocation4], 1
    %s2008 = scalar_lea.sflag [#allocation4], 1
    %2009 = vsyncpa %s2008, 1
    %2010 = vsyncpa [#allocation6], 1
    %2011 = vsyncpa [#allocation9], 1
    %s2012 = scalar_lea.sflag [#allocation9], 1
    %2013 = vsyncpa %s2012, 1

</llo_original>
